<compile_context>
chip_gen: v7x
topology: tpu7x:2x2x1
jax: 0.10.0
libtpu: 0.0.40
codegen_flags: <defaults>
</compile_context>

<pallas_src>
import functools
import math

import numpy as np
import jax
import jax.numpy as jnp
from jax import lax
from jax.experimental import pallas as pl
from jax.experimental.pallas import tpu as pltpu


MATMUL_DTYPE = jnp.bfloat16   # MXU operand dtype (accumulation is always f32)
SUBLANE = 8                   # f32 sublane tile
BP_BLOCK = 8                  # batch rows per grid step (one sublane tile)
UNROLL_T_MAX = 16             # fully unroll the recurrence while T is this small


def ruber_unrefer_kernel(
    x_ref,        # [T, BPb, 4E] f32   per-chain input streams (qf|qb|rf|rb)
    wih_ref,      # [4E, 12H]    bf16  block input->gate weights, gate-major columns
    bgi_ref,      # [1, 12H]     f32   b_ih (all gates) + b_hh (r,z gates), folded
    whh_rz_ref,   # [4H, 8H]     bf16  hidden->gate weights, r|z gate columns
    whh_n_ref,    # [4H, 4H]     bf16  hidden->gate weights, n gate columns
    bhhn_ref,     # [1, 4H]      f32   b_hh for the n gate (cannot be folded)
    head_ref,     # [4H, 2H]     bf16  fused epilogue weights [[M,Wq],[M,Wq],[0,Wr],[0,Wr]]
    ws_ref,       # [1, H]       f32   media_layer weight row for the bilinear score
    mb_ref,       # [1, H]       f32   media_layer bias
    ow_ref,       # [1, H]       f32   opt weight (transposed)
    ob_ref,       # [1, 1]       f32   opt bias
    out_ref,      # [BPb, 128]   f32   lane-dense output tile (col 0 holds the score)
    gi_ref,       # scratch [T, BPb, 12H] f32  precomputed input-side gate activations
    *, T, BPb, Tq, Tr, H,
):
    G = 4 * H   # per-gate lane width: all 4 chains side by side (== 128 at H=32)
    EE = x_ref.shape[-1]

    # ---- Hoisted input-side matmul: all timesteps, chains and gates at once ----
    x2 = x_ref[...].reshape(T * BPb, EE).astype(MATMUL_DTYPE)
    gi_all = (jnp.dot(x2, wih_ref[...], preferred_element_type=jnp.float32)
              + bgi_ref[...])
    gi_ref[...] = gi_all.reshape(T, BPb, 3 * G)

    whh_rz = whh_rz_ref[...]
    whh_n = whh_n_ref[...]
    bhhn = jnp.broadcast_to(bhhn_ref[...], (BPb, G))          # hoisted broadcast
    # lanes [0, 2H) belong to the query chains, [2H, 4H) to the reply chains
    is_q_lane = lax.broadcasted_iota(jnp.int32, (BPb, G), 1) < 2 * H

    def gru_step(gi_t, h):
        hb = h.astype(MATMUL_DTYPE)
        # Split dots: r/z columns finish (and feed the EUP sigmoids) while the
        # n-gate columns are still draining from the MXU.
        gh_rz = jnp.dot(hb, whh_rz, preferred_element_type=jnp.float32)  # [BPb, 2G]
        gh_n = jnp.dot(hb, whh_n, preferred_element_type=jnp.float32)    # [BPb, G]
        r = jax.nn.sigmoid(gi_t[:, 0:G] + gh_rz[:, 0:G])
        z = jax.nn.sigmoid(gi_t[:, G:2 * G] + gh_rz[:, G:2 * G])
        n = jnp.tanh(gi_t[:, 2 * G:3 * G] + r * (gh_n + bhhn))
        return (1.0 - z) * n + z * h

    h = jnp.zeros((BPb, G), dtype=jnp.float32)
    if T <= UNROLL_T_MAX:
        for t in range(T):                 # fully unrolled (T is small & static)
            h_new = gru_step(gi_ref[t], h)
            if t < Tq and t < Tr:
                h = h_new
            elif t < Tq:                   # reply chains already finished: freeze
                h = jnp.where(is_q_lane, h_new, h)
            else:                          # t < Tr, query chains finished: freeze
                h = jnp.where(is_q_lane, h, h_new)
    else:
        def body(t, h):
            h_new = gru_step(gi_ref[t], h)
            upd = jnp.logical_or(
                jnp.logical_and(is_q_lane, t < Tq),
                jnp.logical_and(jnp.logical_not(is_q_lane), t < Tr))
            return jnp.where(upd, h_new, h)
        h = lax.fori_loop(0, T, body, h, unroll=2)

    # Bidirectional summed final reply hidden (qh is consumed only via head_ref).
    rh = h[:, 2 * H:3 * H] + h[:, 3 * H:4 * H]                # [BPb, H]

    # Fused epilogue matmul: columns [0,H) = qh@M ; columns [H,2H) = qh@Wq + rh@Wr.
    prod = jnp.dot(h.astype(MATMUL_DTYPE), head_ref[...],
                   preferred_element_type=jnp.float32)        # [BPb, 2H]

    # score_b = qh_b @ M @ rh_b
    score = jnp.sum(prod[:, 0:H] * rh, axis=1, keepdims=True)  # [BPb, 1]

    # media_layer(concat([qh, score, rh], 1)) then tanh.
    lin = jnp.tanh(prod[:, H:2 * H] + score * ws_ref[...] + mb_ref[...])
    # TODO(synk): nn.Dropout is stochastic in training mode; this kernel uses
    # inference semantics (dropout == identity).

    out = jax.nn.sigmoid(
        jnp.sum(lin * ow_ref[...], axis=1, keepdims=True) + ob_ref[...])   # [BPb,1]
    out_ref[...] = jnp.broadcast_to(out, out_ref.shape)       # lane-dense store


def init_params(key, query_inpt_size, reply_inpt_size, embed_size, hidden_size):
    H, E = hidden_size, embed_size
    ks = iter(jax.random.split(key, 24))
    nxt = lambda: next(ks)
    sH = 1.0 / math.sqrt(H)
    sM = 1.0 / math.sqrt(2 * H + 1)

    def uni(shape, s):
        return jax.random.uniform(nxt(), shape, jnp.float32, -s, s)

    params = {
        # embeddings (torch default: N(0, 1))
        "q_embed": jax.random.normal(nxt(), (query_inpt_size, E), jnp.float32),
        "r_embed": jax.random.normal(nxt(), (reply_inpt_size, E), jnp.float32),
        # query GRU, forward dir (l0): biases filled with 0 in init_weight()
        "q_wih_f": uni((E, 3 * H), sH), "q_whh_f": uni((H, 3 * H), sH),
        "q_bih_f": jnp.zeros((1, 3 * H), jnp.float32),
        "q_bhh_f": jnp.zeros((1, 3 * H), jnp.float32),
        # query GRU, reverse dir (default torch init)
        "q_wih_b": uni((E, 3 * H), sH), "q_whh_b": uni((H, 3 * H), sH),
        "q_bih_b": uni((1, 3 * H), sH), "q_bhh_b": uni((1, 3 * H), sH),
        # reply GRU, forward dir
        "r_wih_f": uni((E, 3 * H), sH), "r_whh_f": uni((H, 3 * H), sH),
        "r_bih_f": jnp.zeros((1, 3 * H), jnp.float32),
        "r_bhh_f": jnp.zeros((1, 3 * H), jnp.float32),
        # reply GRU, reverse dir
        "r_wih_b": uni((E, 3 * H), sH), "r_whh_b": uni((H, 3 * H), sH),
        "r_bih_b": uni((1, 3 * H), sH), "r_bhh_b": uni((1, 3 * H), sH),
        # M = torch.rand(H, H)  (uniform [0, 1))
        "M": jax.random.uniform(nxt(), (H, H), jnp.float32, 0.0, 1.0),
        # media_layer: Linear(2H+1, H)
        "media_w": uni((2 * H + 1, H), sM), "media_b": uni((1, H), sM),
        # opt: Linear(H, 1)
        "opt_w": uni((H, 1), sH), "opt_b": uni((1, 1), sH),
    }
    return params


def pack_params(params, embed_size, hidden_size):
    """Repack per-chain GRU weights into the merged, gate-major block layout."""
    H, E = hidden_size, embed_size
    G = 4 * H
    chains = (("q_wih_f", "q_whh_f", "q_bih_f", "q_bhh_f"),
              ("q_wih_b", "q_whh_b", "q_bih_b", "q_bhh_b"),
              ("r_wih_f", "r_whh_f", "r_bih_f", "r_bhh_f"),
              ("r_wih_b", "r_whh_b", "r_bih_b", "r_bhh_b"))
    wih_big = np.zeros((4 * E, 3 * G), np.float32)
    whh_big = np.zeros((G, 3 * G), np.float32)
    bgi = np.zeros((1, 3 * G), np.float32)
    bhhn = np.zeros((1, G), np.float32)
    for c, (kih, khh, kbih, kbhh) in enumerate(chains):
        wih = np.asarray(params[kih]); whh = np.asarray(params[khh])
        bih = np.asarray(params[kbih]); bhh = np.asarray(params[kbhh])
        for g in range(3):                                   # gate order (r, z, n)
            col = g * G + c * H
            wih_big[c * E:(c + 1) * E, col:col + H] = wih[:, g * H:(g + 1) * H]
            whh_big[c * H:(c + 1) * H, col:col + H] = whh[:, g * H:(g + 1) * H]
            bgi[:, col:col + H] = bih[:, g * H:(g + 1) * H]
            if g < 2:                 # b_hh of r and z gates folds into the precompute
                bgi[:, col:col + H] += bhh[:, g * H:(g + 1) * H]
        bhhn[:, c * H:(c + 1) * H] = bhh[:, 2 * H:3 * H]

    media_w = np.asarray(params["media_w"])
    M = np.asarray(params["M"])
    wq = media_w[0:H, :]
    wr = media_w[H + 1:2 * H + 1, :]
    # Fused epilogue RHS on the chain layout of h = [qf | qb | rf | rb]:
    #   prod[:, :H]  = (h_qf + h_qb) @ M            (bilinear score input)
    #   prod[:, H:]  = (h_qf + h_qb) @ Wq + (h_rf + h_rb) @ Wr
    head_w = np.zeros((G, 2 * H), np.float32)
    head_w[0:H, 0:H] = M
    head_w[H:2 * H, 0:H] = M
    head_w[0:H, H:2 * H] = wq
    head_w[H:2 * H, H:2 * H] = wq
    head_w[2 * H:3 * H, H:2 * H] = wr
    head_w[3 * H:4 * H, H:2 * H] = wr

    return {
        "q_embed": params["q_embed"],
        "r_embed": params["r_embed"],
        "wih_big": jnp.asarray(wih_big, MATMUL_DTYPE),
        "whh_rz": jnp.asarray(whh_big[:, 0:2 * G], MATMUL_DTYPE),
        "whh_n": jnp.asarray(whh_big[:, 2 * G:3 * G], MATMUL_DTYPE),
        "bgi": jnp.asarray(bgi),
        "bhhn": jnp.asarray(bhhn),
        "head_w": jnp.asarray(head_w, MATMUL_DTYPE),
        "ws": jnp.asarray(media_w[H:H + 1, :]),
        "mb": params["media_b"],
        "ow": jnp.asarray(np.asarray(params["opt_w"]).T),    # [1, H]
        "ob": params["opt_b"],                               # [1, 1]
    }


def _full_spec(arr):
    zeros = (0,) * arr.ndim
    return pl.BlockSpec(arr.shape, lambda i, _z=zeros: _z)


@jax.jit
def ruber_unrefer_forward(query, in_lengths, reply, out_lengths, packed):
    # in_lengths / out_lengths are unused, exactly as in the PyTorch forward.
    del in_lengths, out_lengths
    Tq, B = query.shape
    Tr = reply.shape[0]
    T = max(Tq, Tr)
    nb = max(1, -(-B // BP_BLOCK))          # batch grid blocks
    BP = nb * BP_BLOCK                      # padded batch
    H = packed["bhhn"].shape[1] // 4
    E = packed["q_embed"].shape[1]
    G = 4 * H

    q_emb = packed["q_embed"][query].astype(jnp.float32)     # [Tq, B, E]
    r_emb = packed["r_embed"][reply].astype(jnp.float32)     # [Tr, B, E]

    def stream(x, flip):
        if flip:
            x = jnp.flip(x, axis=0)
        return jnp.pad(x, ((0, T - x.shape[0]), (0, BP - B), (0, 0)))

    # Per-chain input streams (q_fwd | q_bwd | r_fwd | r_bwd) along lanes.
    x = jnp.concatenate(
        [stream(q_emb, False), stream(q_emb, True),
         stream(r_emb, False), stream(r_emb, True)], axis=-1)   # [T, BP, 4E] f32

    kernel = functools.partial(ruber_unrefer_kernel,
                               T=T, BPb=BP_BLOCK, Tq=Tq, Tr=Tr, H=H)

    weights = (packed["wih_big"], packed["bgi"], packed["whh_rz"],
               packed["whh_n"], packed["bhhn"], packed["head_w"],
               packed["ws"], packed["mb"], packed["ow"], packed["ob"])

    # NOTE: total VMEM footprint here is a few hundred KiB; no explicit
    # vmem_limit_bytes needed even for v7x (64 MiB physical / 32 MiB scoped default).
    out = pl.pallas_call(
        kernel,
        out_shape=jax.ShapeDtypeStruct((BP, 128), jnp.float32),
        grid_spec=pltpu.PrefetchScalarGridSpec(
            num_scalar_prefetch=0,
            grid=(nb,),
            in_specs=[pl.BlockSpec((T, BP_BLOCK, 4 * E), lambda i: (0, i, 0))]
                     + [_full_spec(w) for w in weights],
            out_specs=pl.BlockSpec((BP_BLOCK, 128), lambda i: (i, 0)),
            scratch_shapes=[pltpu.VMEM((T, BP_BLOCK, 3 * G), jnp.float32)]),
        compiler_params=pltpu.CompilerParams(
            dimension_semantics=("parallel",)),
    )(x, *weights)
    return out[:B, 0]  # [B]


if __name__ == "__main__":
    key = jax.random.PRNGKey(0)
    query_inpt_size, reply_inpt_size = 50, 60
    embed_size, hidden_size = 32, 32
    Tq, Tr, B = 8, 6, 2

    k_params, k_q, k_r = jax.random.split(key, 3)
    params = init_params(k_params, query_inpt_size, reply_inpt_size,
                         embed_size, hidden_size)
    packed = pack_params(params, embed_size, hidden_size)

    query = jax.random.randint(k_q, (Tq, B), 0, query_inpt_size, dtype=jnp.int32)
    reply = jax.random.randint(k_r, (Tr, B), 0, reply_inpt_size, dtype=jnp.int32)
    in_lengths = jnp.full((B,), Tq, dtype=jnp.int32)
    out_lengths = jnp.full((B,), Tr, dtype=jnp.int32)

    out = ruber_unrefer_forward(query, in_lengths, reply, out_lengths, packed)
    jax.block_until_ready(out)
    assert out.shape == (B,) and out.dtype == jnp.float32
    assert bool(jnp.all(jnp.isfinite(out)))
    assert bool(jnp.all((out > 0.0) & (out < 1.0)))
    print("KERNEL_OK")
</pallas_src>

<mosaic_0001>
module attributes {stable_mosaic.version = 11 : i64} {
  func.func @ruber_unrefer_kernel(%arg0: i32, %arg1: memref<8x8x128xf32, #tpu.memory_space<vmem>>, %arg2: memref<128x384xbf16, #tpu.memory_space<vmem>>, %arg3: memref<1x384xf32, #tpu.memory_space<vmem>>, %arg4: memref<128x256xbf16, #tpu.memory_space<vmem>>, %arg5: memref<128x128xbf16, #tpu.memory_space<vmem>>, %arg6: memref<1x128xf32, #tpu.memory_space<vmem>>, %arg7: memref<128x64xbf16, #tpu.memory_space<vmem>>, %arg8: memref<1x32xf32, #tpu.memory_space<vmem>>, %arg9: memref<1x32xf32, #tpu.memory_space<vmem>>, %arg10: memref<1x32xf32, #tpu.memory_space<vmem>>, %arg11: memref<1x1xf32, #tpu.memory_space<vmem>>, %arg12: memref<8x128xf32, #tpu.memory_space<vmem>>, %arg13: memref<8x8x384xf32, #tpu.memory_space<vmem>>) attributes {dimension_semantics = [#tpu.dimension_semantics<parallel>], iteration_bounds = array<i64: 1>, scalar_prefetch = 0 : i64, scratch_operands = 1 : i64, tpu.core_type = #tpu.core_type<tc>, window_params = [{transform_indices = @transform_0, window_bounds = array<i64: 8, 8, 128>}, {pipeline_mode = #tpu.pipeline_mode<synchronous>, transform_indices = @transform_1, window_bounds = array<i64: 128, 384>}, {pipeline_mode = #tpu.pipeline_mode<synchronous>, transform_indices = @transform_2, window_bounds = array<i64: 1, 384>}, {pipeline_mode = #tpu.pipeline_mode<synchronous>, transform_indices = @transform_3, window_bounds = array<i64: 128, 256>}, {pipeline_mode = #tpu.pipeline_mode<synchronous>, transform_indices = @transform_4, window_bounds = array<i64: 128, 128>}, {pipeline_mode = #tpu.pipeline_mode<synchronous>, transform_indices = @transform_5, window_bounds = array<i64: 1, 128>}, {pipeline_mode = #tpu.pipeline_mode<synchronous>, transform_indices = @transform_6, window_bounds = array<i64: 128, 64>}, {pipeline_mode = #tpu.pipeline_mode<synchronous>, transform_indices = @transform_7, window_bounds = array<i64: 1, 32>}, {pipeline_mode = #tpu.pipeline_mode<synchronous>, transform_indices = @transform_8, window_bounds = array<i64: 1, 32>}, {pipeline_mode = #tpu.pipeline_mode<synchronous>, transform_indices = @transform_9, window_bounds = array<i64: 1, 32>}, {pipeline_mode = #tpu.pipeline_mode<synchronous>, transform_indices = @transform_10, window_bounds = array<i64: 1, 1>}, {transform_indices = @transform_11, window_bounds = array<i64: 8, 128>}]} {
    %c0 = arith.constant 0 : index
    %c0_0 = arith.constant 0 : index
    %c0_1 = arith.constant 0 : index
    %0 = vector.load %arg1[%c0, %c0_0, %c0_1] : memref<8x8x128xf32, #tpu.memory_space<vmem>>, vector<8x8x128xf32>
    %1 = vector.shape_cast %0 : vector<8x8x128xf32> to vector<64x128xf32>
    %2 = arith.truncf %1 : vector<64x128xf32> to vector<64x128xbf16>
    %c0_2 = arith.constant 0 : index
    %c0_3 = arith.constant 0 : index
    %3 = vector.load %arg2[%c0_2, %c0_3] : memref<128x384xbf16, #tpu.memory_space<vmem>>, vector<128x384xbf16>
    %cst = arith.constant dense<0.000000e+00> : vector<64x384xf32>
    %4 = tpu.matmul %2, %3, %cst {dimension_numbers = #tpu.dot_dimension_numbers<[1], [0], [0], [1], [0, 0, 1, 1], [], []>} : vector<64x128xbf16>, vector<128x384xbf16>, vector<64x384xf32> -> vector<64x384xf32>
    %c0_4 = arith.constant 0 : index
    %c0_5 = arith.constant 0 : index
    %5 = vector.load %arg3[%c0_4, %c0_5] : memref<1x384xf32, #tpu.memory_space<vmem>>, vector<1x384xf32>
    %6 = vector.broadcast %5 : vector<1x384xf32> to vector<64x384xf32>
    %7 = arith.addf %4, %6 : vector<64x384xf32>
    %8 = vector.shape_cast %7 : vector<64x384xf32> to vector<8x8x384xf32>
    %c0_6 = arith.constant 0 : index
    %c0_7 = arith.constant 0 : index
    %c0_8 = arith.constant 0 : index
    %9 = vector.load %arg13[%c0_6, %c0_7, %c0_8] : memref<8x8x384xf32, #tpu.memory_space<vmem>>, vector<8x8x384xf32>
    tpu.vector_store %arg13[%c0_6, %c0_7, %c0_8], %8 {strides = array<i32>} : memref<8x8x384xf32, #tpu.memory_space<vmem>>, vector<8x8x384xf32>,
    %c0_9 = arith.constant 0 : index
    %c0_10 = arith.constant 0 : index
    %10 = vector.load %arg4[%c0_9, %c0_10] : memref<128x256xbf16, #tpu.memory_space<vmem>>, vector<128x256xbf16>
    %c0_11 = arith.constant 0 : index
    %c0_12 = arith.constant 0 : index
    %11 = vector.load %arg5[%c0_11, %c0_12] : memref<128x128xbf16, #tpu.memory_space<vmem>>, vector<128x128xbf16>
    %c0_13 = arith.constant 0 : index
    %c0_14 = arith.constant 0 : index
    %12 = vector.load %arg6[%c0_13, %c0_14] : memref<1x128xf32, #tpu.memory_space<vmem>>, vector<1x128xf32>
    %13 = vector.shape_cast %12 : vector<1x128xf32> to vector<1x128xf32>
    %14 = vector.broadcast %13 : vector<1x128xf32> to vector<8x128xf32>
    %15 = tpu.iota {dimensions = array<i32: 1>} : vector<8x128xi32>
    %c64_i32 = arith.constant 64 : i32
    %16 = vector.broadcast %c64_i32 : i32 to vector<8x128xi32>
    %17 = arith.cmpi slt, %15, %16 : vector<8x128xi32>
    %cst_15 = arith.constant 0.000000e+00 : f32
    %18 = vector.broadcast %cst_15 : f32 to vector<8x128xf32>
    %c0_16 = arith.constant 0 : index
    %c0_17 = arith.constant 0 : index
    %c0_18 = arith.constant 0 : index
    %19 = vector.load %arg13[%c0_16, %c0_17, %c0_18] : memref<8x8x384xf32, #tpu.memory_space<vmem>>, vector<1x8x384xf32>
    %20 = vector.shape_cast %19 : vector<1x8x384xf32> to vector<8x384xf32>
    %21 = arith.truncf %18 : vector<8x128xf32> to vector<8x128xbf16>
    %cst_19 = arith.constant dense<0.000000e+00> : vector<8x256xf32>
    %22 = tpu.matmul %21, %10, %cst_19 {dimension_numbers = #tpu.dot_dimension_numbers<[1], [0], [0], [1], [0, 0, 1, 1], [], []>} : vector<8x128xbf16>, vector<128x256xbf16>, vector<8x256xf32> -> vector<8x256xf32>
    %cst_20 = arith.constant dense<0.000000e+00> : vector<8x128xf32>
    %23 = tpu.matmul %21, %11, %cst_20 {dimension_numbers = #tpu.dot_dimension_numbers<[1], [0], [0], [1], [0, 0, 1, 1], [], []>} : vector<8x128xbf16>, vector<128x128xbf16>, vector<8x128xf32> -> vector<8x128xf32>
    %24 = vector.extract_strided_slice %20 {offsets = [0, 0], sizes = [8, 128], strides = [1, 1]} : vector<8x384xf32> to vector<8x128xf32>
    %25 = vector.extract_strided_slice %22 {offsets = [0, 0], sizes = [8, 128], strides = [1, 1]} : vector<8x256xf32> to vector<8x128xf32>
    %26 = arith.addf %24, %25 : vector<8x128xf32>
    %27 = arith.negf %26 : vector<8x128xf32>
    %28 = math.exp %27 : vector<8x128xf32>
    %cst_21 = arith.constant 1.000000e+00 : f32
    %29 = vector.broadcast %cst_21 : f32 to vector<8x128xf32>
    %30 = arith.addf %29, %28 : vector<8x128xf32>
    %31 = arith.divf %29, %30 : vector<8x128xf32>
    %32 = vector.extract_strided_slice %20 {offsets = [0, 128], sizes = [8, 128], strides = [1, 1]} : vector<8x384xf32> to vector<8x128xf32>
    %33 = vector.extract_strided_slice %22 {offsets = [0, 128], sizes = [8, 128], strides = [1, 1]} : vector<8x256xf32> to vector<8x128xf32>
    %34 = arith.addf %32, %33 : vector<8x128xf32>
    %35 = arith.negf %34 : vector<8x128xf32>
    %36 = math.exp %35 : vector<8x128xf32>
    %cst_22 = arith.constant 1.000000e+00 : f32
    %37 = vector.broadcast %cst_22 : f32 to vector<8x128xf32>
    %38 = arith.addf %37, %36 : vector<8x128xf32>
    %39 = arith.divf %37, %38 : vector<8x128xf32>
    %40 = vector.extract_strided_slice %20 {offsets = [0, 256], sizes = [8, 128], strides = [1, 1]} : vector<8x384xf32> to vector<8x128xf32>
    %41 = arith.addf %23, %14 : vector<8x128xf32>
    %42 = arith.mulf %31, %41 : vector<8x128xf32>
    %43 = arith.addf %40, %42 : vector<8x128xf32>
    %44 = math.tanh %43 : vector<8x128xf32>
    %cst_23 = arith.constant 1.000000e+00 : f32
    %45 = vector.broadcast %cst_23 : f32 to vector<8x128xf32>
    %46 = arith.subf %45, %39 : vector<8x128xf32>
    %47 = arith.mulf %46, %44 : vector<8x128xf32>
    %48 = arith.mulf %39, %18 : vector<8x128xf32>
    %49 = arith.addf %47, %48 : vector<8x128xf32>
    %c1 = arith.constant 1 : index
    %c0_24 = arith.constant 0 : index
    %c0_25 = arith.constant 0 : index
    %50 = vector.load %arg13[%c1, %c0_24, %c0_25] : memref<8x8x384xf32, #tpu.memory_space<vmem>>, vector<1x8x384xf32>
    %51 = vector.shape_cast %50 : vector<1x8x384xf32> to vector<8x384xf32>
    %52 = arith.truncf %49 : vector<8x128xf32> to vector<8x128xbf16>
    %cst_26 = arith.constant dense<0.000000e+00> : vector<8x256xf32>
    %53 = tpu.matmul %52, %10, %cst_26 {dimension_numbers = #tpu.dot_dimension_numbers<[1], [0], [0], [1], [0, 0, 1, 1], [], []>} : vector<8x128xbf16>, vector<128x256xbf16>, vector<8x256xf32> -> vector<8x256xf32>
    %cst_27 = arith.constant dense<0.000000e+00> : vector<8x128xf32>
    %54 = tpu.matmul %52, %11, %cst_27 {dimension_numbers = #tpu.dot_dimension_numbers<[1], [0], [0], [1], [0, 0, 1, 1], [], []>} : vector<8x128xbf16>, vector<128x128xbf16>, vector<8x128xf32> -> vector<8x128xf32>
    %55 = vector.extract_strided_slice %51 {offsets = [0, 0], sizes = [8, 128], strides = [1, 1]} : vector<8x384xf32> to vector<8x128xf32>
    %56 = vector.extract_strided_slice %53 {offsets = [0, 0], sizes = [8, 128], strides = [1, 1]} : vector<8x256xf32> to vector<8x128xf32>
    %57 = arith.addf %55, %56 : vector<8x128xf32>
    %58 = arith.negf %57 : vector<8x128xf32>
    %59 = math.exp %58 : vector<8x128xf32>
    %cst_28 = arith.constant 1.000000e+00 : f32
    %60 = vector.broadcast %cst_28 : f32 to vector<8x128xf32>
    %61 = arith.addf %60, %59 : vector<8x128xf32>
    %62 = arith.divf %60, %61 : vector<8x128xf32>
    %63 = vector.extract_strided_slice %51 {offsets = [0, 128], sizes = [8, 128], strides = [1, 1]} : vector<8x384xf32> to vector<8x128xf32>
    %64 = vector.extract_strided_slice %53 {offsets = [0, 128], sizes = [8, 128], strides = [1, 1]} : vector<8x256xf32> to vector<8x128xf32>
    %65 = arith.addf %63, %64 : vector<8x128xf32>
    %66 = arith.negf %65 : vector<8x128xf32>
    %67 = math.exp %66 : vector<8x128xf32>
    %cst_29 = arith.constant 1.000000e+00 : f32
    %68 = vector.broadcast %cst_29 : f32 to vector<8x128xf32>
    %69 = arith.addf %68, %67 : vector<8x128xf32>
    %70 = arith.divf %68, %69 : vector<8x128xf32>
    %71 = vector.extract_strided_slice %51 {offsets = [0, 256], sizes = [8, 128], strides = [1, 1]} : vector<8x384xf32> to vector<8x128xf32>
    %72 = arith.addf %54, %14 : vector<8x128xf32>
    %73 = arith.mulf %62, %72 : vector<8x128xf32>
    %74 = arith.addf %71, %73 : vector<8x128xf32>
    %75 = math.tanh %74 : vector<8x128xf32>
    %cst_30 = arith.constant 1.000000e+00 : f32
    %76 = vector.broadcast %cst_30 : f32 to vector<8x128xf32>
    %77 = arith.subf %76, %70 : vector<8x128xf32>
    %78 = arith.mulf %77, %75 : vector<8x128xf32>
    %79 = arith.mulf %70, %49 : vector<8x128xf32>
    %80 = arith.addf %78, %79 : vector<8x128xf32>
    %c2 = arith.constant 2 : index
    %c0_31 = arith.constant 0 : index
    %c0_32 = arith.constant 0 : index
    %81 = vector.load %arg13[%c2, %c0_31, %c0_32] : memref<8x8x384xf32, #tpu.memory_space<vmem>>, vector<1x8x384xf32>
    %82 = vector.shape_cast %81 : vector<1x8x384xf32> to vector<8x384xf32>
    %83 = arith.truncf %80 : vector<8x128xf32> to vector<8x128xbf16>
    %cst_33 = arith.constant dense<0.000000e+00> : vector<8x256xf32>
    %84 = tpu.matmul %83, %10, %cst_33 {dimension_numbers = #tpu.dot_dimension_numbers<[1], [0], [0], [1], [0, 0, 1, 1], [], []>} : vector<8x128xbf16>, vector<128x256xbf16>, vector<8x256xf32> -> vector<8x256xf32>
    %cst_34 = arith.constant dense<0.000000e+00> : vector<8x128xf32>
    %85 = tpu.matmul %83, %11, %cst_34 {dimension_numbers = #tpu.dot_dimension_numbers<[1], [0], [0], [1], [0, 0, 1, 1], [], []>} : vector<8x128xbf16>, vector<128x128xbf16>, vector<8x128xf32> -> vector<8x128xf32>
    %86 = vector.extract_strided_slice %82 {offsets = [0, 0], sizes = [8, 128], strides = [1, 1]} : vector<8x384xf32> to vector<8x128xf32>
    %87 = vector.extract_strided_slice %84 {offsets = [0, 0], sizes = [8, 128], strides = [1, 1]} : vector<8x256xf32> to vector<8x128xf32>
    %88 = arith.addf %86, %87 : vector<8x128xf32>
    %89 = arith.negf %88 : vector<8x128xf32>
    %90 = math.exp %89 : vector<8x128xf32>
    %cst_35 = arith.constant 1.000000e+00 : f32
    %91 = vector.broadcast %cst_35 : f32 to vector<8x128xf32>
    %92 = arith.addf %91, %90 : vector<8x128xf32>
    %93 = arith.divf %91, %92 : vector<8x128xf32>
    %94 = vector.extract_strided_slice %82 {offsets = [0, 128], sizes = [8, 128], strides = [1, 1]} : vector<8x384xf32> to vector<8x128xf32>
    %95 = vector.extract_strided_slice %84 {offsets = [0, 128], sizes = [8, 128], strides = [1, 1]} : vector<8x256xf32> to vector<8x128xf32>
    %96 = arith.addf %94, %95 : vector<8x128xf32>
    %97 = arith.negf %96 : vector<8x128xf32>
    %98 = math.exp %97 : vector<8x128xf32>
    %cst_36 = arith.constant 1.000000e+00 : f32
    %99 = vector.broadcast %cst_36 : f32 to vector<8x128xf32>
    %100 = arith.addf %99, %98 : vector<8x128xf32>
    %101 = arith.divf %99, %100 : vector<8x128xf32>
    %102 = vector.extract_strided_slice %82 {offsets = [0, 256], sizes = [8, 128], strides = [1, 1]} : vector<8x384xf32> to vector<8x128xf32>
    %103 = arith.addf %85, %14 : vector<8x128xf32>
    %104 = arith.mulf %93, %103 : vector<8x128xf32>
    %105 = arith.addf %102, %104 : vector<8x128xf32>
    %106 = math.tanh %105 : vector<8x128xf32>
    %cst_37 = arith.constant 1.000000e+00 : f32
    %107 = vector.broadcast %cst_37 : f32 to vector<8x128xf32>
    %108 = arith.subf %107, %101 : vector<8x128xf32>
    %109 = arith.mulf %108, %106 : vector<8x128xf32>
    %110 = arith.mulf %101, %80 : vector<8x128xf32>
    %111 = arith.addf %109, %110 : vector<8x128xf32>
    %c3 = arith.constant 3 : index
    %c0_38 = arith.constant 0 : index
    %c0_39 = arith.constant 0 : index
    %112 = vector.load %arg13[%c3, %c0_38, %c0_39] : memref<8x8x384xf32, #tpu.memory_space<vmem>>, vector<1x8x384xf32>
    %113 = vector.shape_cast %112 : vector<1x8x384xf32> to vector<8x384xf32>
    %114 = arith.truncf %111 : vector<8x128xf32> to vector<8x128xbf16>
    %cst_40 = arith.constant dense<0.000000e+00> : vector<8x256xf32>
    %115 = tpu.matmul %114, %10, %cst_40 {dimension_numbers = #tpu.dot_dimension_numbers<[1], [0], [0], [1], [0, 0, 1, 1], [], []>} : vector<8x128xbf16>, vector<128x256xbf16>, vector<8x256xf32> -> vector<8x256xf32>
    %cst_41 = arith.constant dense<0.000000e+00> : vector<8x128xf32>
    %116 = tpu.matmul %114, %11, %cst_41 {dimension_numbers = #tpu.dot_dimension_numbers<[1], [0], [0], [1], [0, 0, 1, 1], [], []>} : vector<8x128xbf16>, vector<128x128xbf16>, vector<8x128xf32> -> vector<8x128xf32>
    %117 = vector.extract_strided_slice %113 {offsets = [0, 0], sizes = [8, 128], strides = [1, 1]} : vector<8x384xf32> to vector<8x128xf32>
    %118 = vector.extract_strided_slice %115 {offsets = [0, 0], sizes = [8, 128], strides = [1, 1]} : vector<8x256xf32> to vector<8x128xf32>
    %119 = arith.addf %117, %118 : vector<8x128xf32>
    %120 = arith.negf %119 : vector<8x128xf32>
    %121 = math.exp %120 : vector<8x128xf32>
    %cst_42 = arith.constant 1.000000e+00 : f32
    %122 = vector.broadcast %cst_42 : f32 to vector<8x128xf32>
    %123 = arith.addf %122, %121 : vector<8x128xf32>
    %124 = arith.divf %122, %123 : vector<8x128xf32>
    %125 = vector.extract_strided_slice %113 {offsets = [0, 128], sizes = [8, 128], strides = [1, 1]} : vector<8x384xf32> to vector<8x128xf32>
    %126 = vector.extract_strided_slice %115 {offsets = [0, 128], sizes = [8, 128], strides = [1, 1]} : vector<8x256xf32> to vector<8x128xf32>
    %127 = arith.addf %125, %126 : vector<8x128xf32>
    %128 = arith.negf %127 : vector<8x128xf32>
    %129 = math.exp %128 : vector<8x128xf32>
    %cst_43 = arith.constant 1.000000e+00 : f32
    %130 = vector.broadcast %cst_43 : f32 to vector<8x128xf32>
    %131 = arith.addf %130, %129 : vector<8x128xf32>
    %132 = arith.divf %130, %131 : vector<8x128xf32>
    %133 = vector.extract_strided_slice %113 {offsets = [0, 256], sizes = [8, 128], strides = [1, 1]} : vector<8x384xf32> to vector<8x128xf32>
    %134 = arith.addf %116, %14 : vector<8x128xf32>
    %135 = arith.mulf %124, %134 : vector<8x128xf32>
    %136 = arith.addf %133, %135 : vector<8x128xf32>
    %137 = math.tanh %136 : vector<8x128xf32>
    %cst_44 = arith.constant 1.000000e+00 : f32
    %138 = vector.broadcast %cst_44 : f32 to vector<8x128xf32>
    %139 = arith.subf %138, %132 : vector<8x128xf32>
    %140 = arith.mulf %139, %137 : vector<8x128xf32>
    %141 = arith.mulf %132, %111 : vector<8x128xf32>
    %142 = arith.addf %140, %141 : vector<8x128xf32>
    %c4 = arith.constant 4 : index
    %c0_45 = arith.constant 0 : index
    %c0_46 = arith.constant 0 : index
    %143 = vector.load %arg13[%c4, %c0_45, %c0_46] : memref<8x8x384xf32, #tpu.memory_space<vmem>>, vector<1x8x384xf32>
    %144 = vector.shape_cast %143 : vector<1x8x384xf32> to vector<8x384xf32>
    %145 = arith.truncf %142 : vector<8x128xf32> to vector<8x128xbf16>
    %cst_47 = arith.constant dense<0.000000e+00> : vector<8x256xf32>
    %146 = tpu.matmul %145, %10, %cst_47 {dimension_numbers = #tpu.dot_dimension_numbers<[1], [0], [0], [1], [0, 0, 1, 1], [], []>} : vector<8x128xbf16>, vector<128x256xbf16>, vector<8x256xf32> -> vector<8x256xf32>
    %cst_48 = arith.constant dense<0.000000e+00> : vector<8x128xf32>
    %147 = tpu.matmul %145, %11, %cst_48 {dimension_numbers = #tpu.dot_dimension_numbers<[1], [0], [0], [1], [0, 0, 1, 1], [], []>} : vector<8x128xbf16>, vector<128x128xbf16>, vector<8x128xf32> -> vector<8x128xf32>
    %148 = vector.extract_strided_slice %144 {offsets = [0, 0], sizes = [8, 128], strides = [1, 1]} : vector<8x384xf32> to vector<8x128xf32>
    %149 = vector.extract_strided_slice %146 {offsets = [0, 0], sizes = [8, 128], strides = [1, 1]} : vector<8x256xf32> to vector<8x128xf32>
    %150 = arith.addf %148, %149 : vector<8x128xf32>
    %151 = arith.negf %150 : vector<8x128xf32>
    %152 = math.exp %151 : vector<8x128xf32>
    %cst_49 = arith.constant 1.000000e+00 : f32
    %153 = vector.broadcast %cst_49 : f32 to vector<8x128xf32>
    %154 = arith.addf %153, %152 : vector<8x128xf32>
    %155 = arith.divf %153, %154 : vector<8x128xf32>
    %156 = vector.extract_strided_slice %144 {offsets = [0, 128], sizes = [8, 128], strides = [1, 1]} : vector<8x384xf32> to vector<8x128xf32>
    %157 = vector.extract_strided_slice %146 {offsets = [0, 128], sizes = [8, 128], strides = [1, 1]} : vector<8x256xf32> to vector<8x128xf32>
    %158 = arith.addf %156, %157 : vector<8x128xf32>
    %159 = arith.negf %158 : vector<8x128xf32>
    %160 = math.exp %159 : vector<8x128xf32>
    %cst_50 = arith.constant 1.000000e+00 : f32
    %161 = vector.broadcast %cst_50 : f32 to vector<8x128xf32>
    %162 = arith.addf %161, %160 : vector<8x128xf32>
    %163 = arith.divf %161, %162 : vector<8x128xf32>
    %164 = vector.extract_strided_slice %144 {offsets = [0, 256], sizes = [8, 128], strides = [1, 1]} : vector<8x384xf32> to vector<8x128xf32>
    %165 = arith.addf %147, %14 : vector<8x128xf32>
    %166 = arith.mulf %155, %165 : vector<8x128xf32>
    %167 = arith.addf %164, %166 : vector<8x128xf32>
    %168 = math.tanh %167 : vector<8x128xf32>
    %cst_51 = arith.constant 1.000000e+00 : f32
    %169 = vector.broadcast %cst_51 : f32 to vector<8x128xf32>
    %170 = arith.subf %169, %163 : vector<8x128xf32>
    %171 = arith.mulf %170, %168 : vector<8x128xf32>
    %172 = arith.mulf %163, %142 : vector<8x128xf32>
    %173 = arith.addf %171, %172 : vector<8x128xf32>
    %c5 = arith.constant 5 : index
    %c0_52 = arith.constant 0 : index
    %c0_53 = arith.constant 0 : index
    %174 = vector.load %arg13[%c5, %c0_52, %c0_53] : memref<8x8x384xf32, #tpu.memory_space<vmem>>, vector<1x8x384xf32>
    %175 = vector.shape_cast %174 : vector<1x8x384xf32> to vector<8x384xf32>
    %176 = arith.truncf %173 : vector<8x128xf32> to vector<8x128xbf16>
    %cst_54 = arith.constant dense<0.000000e+00> : vector<8x256xf32>
    %177 = tpu.matmul %176, %10, %cst_54 {dimension_numbers = #tpu.dot_dimension_numbers<[1], [0], [0], [1], [0, 0, 1, 1], [], []>} : vector<8x128xbf16>, vector<128x256xbf16>, vector<8x256xf32> -> vector<8x256xf32>
    %cst_55 = arith.constant dense<0.000000e+00> : vector<8x128xf32>
    %178 = tpu.matmul %176, %11, %cst_55 {dimension_numbers = #tpu.dot_dimension_numbers<[1], [0], [0], [1], [0, 0, 1, 1], [], []>} : vector<8x128xbf16>, vector<128x128xbf16>, vector<8x128xf32> -> vector<8x128xf32>
    %179 = vector.extract_strided_slice %175 {offsets = [0, 0], sizes = [8, 128], strides = [1, 1]} : vector<8x384xf32> to vector<8x128xf32>
    %180 = vector.extract_strided_slice %177 {offsets = [0, 0], sizes = [8, 128], strides = [1, 1]} : vector<8x256xf32> to vector<8x128xf32>
    %181 = arith.addf %179, %180 : vector<8x128xf32>
    %182 = arith.negf %181 : vector<8x128xf32>
    %183 = math.exp %182 : vector<8x128xf32>
    %cst_56 = arith.constant 1.000000e+00 : f32
    %184 = vector.broadcast %cst_56 : f32 to vector<8x128xf32>
    %185 = arith.addf %184, %183 : vector<8x128xf32>
    %186 = arith.divf %184, %185 : vector<8x128xf32>
    %187 = vector.extract_strided_slice %175 {offsets = [0, 128], sizes = [8, 128], strides = [1, 1]} : vector<8x384xf32> to vector<8x128xf32>
    %188 = vector.extract_strided_slice %177 {offsets = [0, 128], sizes = [8, 128], strides = [1, 1]} : vector<8x256xf32> to vector<8x128xf32>
    %189 = arith.addf %187, %188 : vector<8x128xf32>
    %190 = arith.negf %189 : vector<8x128xf32>
    %191 = math.exp %190 : vector<8x128xf32>
    %cst_57 = arith.constant 1.000000e+00 : f32
    %192 = vector.broadcast %cst_57 : f32 to vector<8x128xf32>
    %193 = arith.addf %192, %191 : vector<8x128xf32>
    %194 = arith.divf %192, %193 : vector<8x128xf32>
    %195 = vector.extract_strided_slice %175 {offsets = [0, 256], sizes = [8, 128], strides = [1, 1]} : vector<8x384xf32> to vector<8x128xf32>
    %196 = arith.addf %178, %14 : vector<8x128xf32>
    %197 = arith.mulf %186, %196 : vector<8x128xf32>
    %198 = arith.addf %195, %197 : vector<8x128xf32>
    %199 = math.tanh %198 : vector<8x128xf32>
    %cst_58 = arith.constant 1.000000e+00 : f32
    %200 = vector.broadcast %cst_58 : f32 to vector<8x128xf32>
    %201 = arith.subf %200, %194 : vector<8x128xf32>
    %202 = arith.mulf %201, %199 : vector<8x128xf32>
    %203 = arith.mulf %194, %173 : vector<8x128xf32>
    %204 = arith.addf %202, %203 : vector<8x128xf32>
    %c6 = arith.constant 6 : index
    %c0_59 = arith.constant 0 : index
    %c0_60 = arith.constant 0 : index
    %205 = vector.load %arg13[%c6, %c0_59, %c0_60] : memref<8x8x384xf32, #tpu.memory_space<vmem>>, vector<1x8x384xf32>
    %206 = vector.shape_cast %205 : vector<1x8x384xf32> to vector<8x384xf32>
    %207 = arith.truncf %204 : vector<8x128xf32> to vector<8x128xbf16>
    %cst_61 = arith.constant dense<0.000000e+00> : vector<8x256xf32>
    %208 = tpu.matmul %207, %10, %cst_61 {dimension_numbers = #tpu.dot_dimension_numbers<[1], [0], [0], [1], [0, 0, 1, 1], [], []>} : vector<8x128xbf16>, vector<128x256xbf16>, vector<8x256xf32> -> vector<8x256xf32>
    %cst_62 = arith.constant dense<0.000000e+00> : vector<8x128xf32>
    %209 = tpu.matmul %207, %11, %cst_62 {dimension_numbers = #tpu.dot_dimension_numbers<[1], [0], [0], [1], [0, 0, 1, 1], [], []>} : vector<8x128xbf16>, vector<128x128xbf16>, vector<8x128xf32> -> vector<8x128xf32>
    %210 = vector.extract_strided_slice %206 {offsets = [0, 0], sizes = [8, 128], strides = [1, 1]} : vector<8x384xf32> to vector<8x128xf32>
    %211 = vector.extract_strided_slice %208 {offsets = [0, 0], sizes = [8, 128], strides = [1, 1]} : vector<8x256xf32> to vector<8x128xf32>
    %212 = arith.addf %210, %211 : vector<8x128xf32>
    %213 = arith.negf %212 : vector<8x128xf32>
    %214 = math.exp %213 : vector<8x128xf32>
    %cst_63 = arith.constant 1.000000e+00 : f32
    %215 = vector.broadcast %cst_63 : f32 to vector<8x128xf32>
    %216 = arith.addf %215, %214 : vector<8x128xf32>
    %217 = arith.divf %215, %216 : vector<8x128xf32>
    %218 = vector.extract_strided_slice %206 {offsets = [0, 128], sizes = [8, 128], strides = [1, 1]} : vector<8x384xf32> to vector<8x128xf32>
    %219 = vector.extract_strided_slice %208 {offsets = [0, 128], sizes = [8, 128], strides = [1, 1]} : vector<8x256xf32> to vector<8x128xf32>
    %220 = arith.addf %218, %219 : vector<8x128xf32>
    %221 = arith.negf %220 : vector<8x128xf32>
    %222 = math.exp %221 : vector<8x128xf32>
    %cst_64 = arith.constant 1.000000e+00 : f32
    %223 = vector.broadcast %cst_64 : f32 to vector<8x128xf32>
    %224 = arith.addf %223, %222 : vector<8x128xf32>
    %225 = arith.divf %223, %224 : vector<8x128xf32>
    %226 = vector.extract_strided_slice %206 {offsets = [0, 256], sizes = [8, 128], strides = [1, 1]} : vector<8x384xf32> to vector<8x128xf32>
    %227 = arith.addf %209, %14 : vector<8x128xf32>
    %228 = arith.mulf %217, %227 : vector<8x128xf32>
    %229 = arith.addf %226, %228 : vector<8x128xf32>
    %230 = math.tanh %229 : vector<8x128xf32>
    %cst_65 = arith.constant 1.000000e+00 : f32
    %231 = vector.broadcast %cst_65 : f32 to vector<8x128xf32>
    %232 = arith.subf %231, %225 : vector<8x128xf32>
    %233 = arith.mulf %232, %230 : vector<8x128xf32>
    %234 = arith.mulf %225, %204 : vector<8x128xf32>
    %235 = arith.addf %233, %234 : vector<8x128xf32>
    %236 = arith.select %17, %235, %204 : vector<8x128xi1>, vector<8x128xf32>
    %c7 = arith.constant 7 : index
    %c0_66 = arith.constant 0 : index
    %c0_67 = arith.constant 0 : index
    %237 = vector.load %arg13[%c7, %c0_66, %c0_67] : memref<8x8x384xf32, #tpu.memory_space<vmem>>, vector<1x8x384xf32>
    %238 = vector.shape_cast %237 : vector<1x8x384xf32> to vector<8x384xf32>
    %239 = arith.truncf %236 : vector<8x128xf32> to vector<8x128xbf16>
    %cst_68 = arith.constant dense<0.000000e+00> : vector<8x256xf32>
    %240 = tpu.matmul %239, %10, %cst_68 {dimension_numbers = #tpu.dot_dimension_numbers<[1], [0], [0], [1], [0, 0, 1, 1], [], []>} : vector<8x128xbf16>, vector<128x256xbf16>, vector<8x256xf32> -> vector<8x256xf32>
    %cst_69 = arith.constant dense<0.000000e+00> : vector<8x128xf32>
    %241 = tpu.matmul %239, %11, %cst_69 {dimension_numbers = #tpu.dot_dimension_numbers<[1], [0], [0], [1], [0, 0, 1, 1], [], []>} : vector<8x128xbf16>, vector<128x128xbf16>, vector<8x128xf32> -> vector<8x128xf32>
    %242 = vector.extract_strided_slice %238 {offsets = [0, 0], sizes = [8, 128], strides = [1, 1]} : vector<8x384xf32> to vector<8x128xf32>
    %243 = vector.extract_strided_slice %240 {offsets = [0, 0], sizes = [8, 128], strides = [1, 1]} : vector<8x256xf32> to vector<8x128xf32>
    %244 = arith.addf %242, %243 : vector<8x128xf32>
    %245 = arith.negf %244 : vector<8x128xf32>
    %246 = math.exp %245 : vector<8x128xf32>
    %cst_70 = arith.constant 1.000000e+00 : f32
    %247 = vector.broadcast %cst_70 : f32 to vector<8x128xf32>
    %248 = arith.addf %247, %246 : vector<8x128xf32>
    %249 = arith.divf %247, %248 : vector<8x128xf32>
    %250 = vector.extract_strided_slice %238 {offsets = [0, 128], sizes = [8, 128], strides = [1, 1]} : vector<8x384xf32> to vector<8x128xf32>
    %251 = vector.extract_strided_slice %240 {offsets = [0, 128], sizes = [8, 128], strides = [1, 1]} : vector<8x256xf32> to vector<8x128xf32>
    %252 = arith.addf %250, %251 : vector<8x128xf32>
    %253 = arith.negf %252 : vector<8x128xf32>
    %254 = math.exp %253 : vector<8x128xf32>
    %cst_71 = arith.constant 1.000000e+00 : f32
    %255 = vector.broadcast %cst_71 : f32 to vector<8x128xf32>
    %256 = arith.addf %255, %254 : vector<8x128xf32>
    %257 = arith.divf %255, %256 : vector<8x128xf32>
    %258 = vector.extract_strided_slice %238 {offsets = [0, 256], sizes = [8, 128], strides = [1, 1]} : vector<8x384xf32> to vector<8x128xf32>
    %259 = arith.addf %241, %14 : vector<8x128xf32>
    %260 = arith.mulf %249, %259 : vector<8x128xf32>
    %261 = arith.addf %258, %260 : vector<8x128xf32>
    %262 = math.tanh %261 : vector<8x128xf32>
    %cst_72 = arith.constant 1.000000e+00 : f32
    %263 = vector.broadcast %cst_72 : f32 to vector<8x128xf32>
    %264 = arith.subf %263, %257 : vector<8x128xf32>
    %265 = arith.mulf %264, %262 : vector<8x128xf32>
    %266 = arith.mulf %257, %236 : vector<8x128xf32>
    %267 = arith.addf %265, %266 : vector<8x128xf32>
    %268 = arith.select %17, %267, %236 : vector<8x128xi1>, vector<8x128xf32>
    %269 = vector.extract_strided_slice %268 {offsets = [0, 64], sizes = [8, 32], strides = [1, 1]} : vector<8x128xf32> to vector<8x32xf32>
    %270 = vector.extract_strided_slice %268 {offsets = [0, 96], sizes = [8, 32], strides = [1, 1]} : vector<8x128xf32> to vector<8x32xf32>
    %271 = arith.addf %269, %270 : vector<8x32xf32>
    %272 = arith.truncf %268 : vector<8x128xf32> to vector<8x128xbf16>
    %c0_73 = arith.constant 0 : index
    %c0_74 = arith.constant 0 : index
    %273 = vector.load %arg7[%c0_73, %c0_74] : memref<128x64xbf16, #tpu.memory_space<vmem>>, vector<128x64xbf16>
    %cst_75 = arith.constant dense<0.000000e+00> : vector<8x64xf32>
    %274 = tpu.matmul %272, %273, %cst_75 {dimension_numbers = #tpu.dot_dimension_numbers<[1], [0], [0], [1], [0, 0, 1, 1], [], []>} : vector<8x128xbf16>, vector<128x64xbf16>, vector<8x64xf32> -> vector<8x64xf32>
    %275 = vector.extract_strided_slice %274 {offsets = [0, 0], sizes = [8, 32], strides = [1, 1]} : vector<8x64xf32> to vector<8x32xf32>
    %276 = arith.mulf %275, %271 : vector<8x32xf32>
    %cst_76 = arith.constant dense<0.000000e+00> : vector<8xf32>
    %277 = vector.multi_reduction <add>, %276, %cst_76 [1] : vector<8x32xf32> to vector<8xf32>
    %278 = vector.shape_cast %277 : vector<8xf32> to vector<8x1xf32>
    %279 = vector.extract_strided_slice %274 {offsets = [0, 32], sizes = [8, 32], strides = [1, 1]} : vector<8x64xf32> to vector<8x32xf32>
    %c0_77 = arith.constant 0 : index
    %c0_78 = arith.constant 0 : index
    %280 = vector.load %arg8[%c0_77, %c0_78] : memref<1x32xf32, #tpu.memory_space<vmem>>, vector<1x32xf32>
    %281 = vector.broadcast %278 : vector<8x1xf32> to vector<8x32xf32>
    %282 = vector.broadcast %280 : vector<1x32xf32> to vector<8x32xf32>
    %283 = arith.mulf %281, %282 : vector<8x32xf32>
    %284 = arith.addf %279, %283 : vector<8x32xf32>
    %c0_79 = arith.constant 0 : index
    %c0_80 = arith.constant 0 : index
    %285 = vector.load %arg9[%c0_79, %c0_80] : memref<1x32xf32, #tpu.memory_space<vmem>>, vector<1x32xf32>
    %286 = vector.broadcast %285 : vector<1x32xf32> to vector<8x32xf32>
    %287 = arith.addf %284, %286 : vector<8x32xf32>
    %288 = math.tanh %287 : vector<8x32xf32>
    %c0_81 = arith.constant 0 : index
    %c0_82 = arith.constant 0 : index
    %289 = vector.load %arg10[%c0_81, %c0_82] : memref<1x32xf32, #tpu.memory_space<vmem>>, vector<1x32xf32>
    %290 = vector.broadcast %289 : vector<1x32xf32> to vector<8x32xf32>
    %291 = arith.mulf %288, %290 : vector<8x32xf32>
    %cst_83 = arith.constant dense<0.000000e+00> : vector<8xf32>
    %292 = vector.multi_reduction <add>, %291, %cst_83 [1] : vector<8x32xf32> to vector<8xf32>
    %293 = vector.shape_cast %292 : vector<8xf32> to vector<8x1xf32>
    %c0_84 = arith.constant 0 : index
    %c0_85 = arith.constant 0 : index
    %294 = vector.load %arg11[%c0_84, %c0_85] : memref<1x1xf32, #tpu.memory_space<vmem>>, vector<1x1xf32>
    %295 = vector.broadcast %294 : vector<1x1xf32> to vector<8x1xf32>
    %296 = arith.addf %293, %295 : vector<8x1xf32>
    %297 = arith.negf %296 : vector<8x1xf32>
    %298 = math.exp %297 : vector<8x1xf32>
    %cst_86 = arith.constant 1.000000e+00 : f32
    %299 = vector.broadcast %cst_86 : f32 to vector<8x1xf32>
    %300 = arith.addf %299, %298 : vector<8x1xf32>
    %301 = arith.divf %299, %300 : vector<8x1xf32>
    %302 = vector.shape_cast %301 : vector<8x1xf32> to vector<8x1xf32>
    %303 = vector.broadcast %302 : vector<8x1xf32> to vector<8x128xf32>
    %c0_87 = arith.constant 0 : index
    %c0_88 = arith.constant 0 : index
    %304 = vector.load %arg12[%c0_87, %c0_88] : memref<8x128xf32, #tpu.memory_space<vmem>>, vector<8x128xf32>
    tpu.vector_store %arg12[%c0_87, %c0_88], %303 {strides = array<i32>} : memref<8x128xf32, #tpu.memory_space<vmem>>, vector<8x128xf32>,
    return
  }
  func.func @transform_0(%arg0: i32) -> (i32, i32, i32) {
    %c0_i32 = arith.constant 0 : i32
    %c0_i32_0 = arith.constant 0 : i32
    %c0_i32_1 = arith.constant 0 : i32
    return %c0_i32, %arg0, %c0_i32_0 : i32, i32, i32
  }
  func.func @transform_1(%arg0: i32) -> (i32, i32) {
    %c0_i32 = arith.constant 0 : i32
    %c0_i32_0 = arith.constant 0 : i32
    %c0_i32_1 = arith.constant 0 : i32
    return %c0_i32, %c0_i32_0 : i32, i32
  }
  func.func @transform_2(%arg0: i32) -> (i32, i32) {
    %c0_i32 = arith.constant 0 : i32
    %c0_i32_0 = arith.constant 0 : i32
    %c0_i32_1 = arith.constant 0 : i32
    return %c0_i32, %c0_i32_0 : i32, i32
  }
  func.func @transform_3(%arg0: i32) -> (i32, i32) {
    %c0_i32 = arith.constant 0 : i32
    %c0_i32_0 = arith.constant 0 : i32
    %c0_i32_1 = arith.constant 0 : i32
    return %c0_i32, %c0_i32_0 : i32, i32
  }
  func.func @transform_4(%arg0: i32) -> (i32, i32) {
    %c0_i32 = arith.constant 0 : i32
    %c0_i32_0 = arith.constant 0 : i32
    %c0_i32_1 = arith.constant 0 : i32
    return %c0_i32, %c0_i32_0 : i32, i32
  }
  func.func @transform_5(%arg0: i32) -> (i32, i32) {
    %c0_i32 = arith.constant 0 : i32
    %c0_i32_0 = arith.constant 0 : i32
    %c0_i32_1 = arith.constant 0 : i32
    return %c0_i32, %c0_i32_0 : i32, i32
  }
  func.func @transform_6(%arg0: i32) -> (i32, i32) {
    %c0_i32 = arith.constant 0 : i32
    %c0_i32_0 = arith.constant 0 : i32
    %c0_i32_1 = arith.constant 0 : i32
    return %c0_i32, %c0_i32_0 : i32, i32
  }
  func.func @transform_7(%arg0: i32) -> (i32, i32) {
    %c0_i32 = arith.constant 0 : i32
    %c0_i32_0 = arith.constant 0 : i32
    %c0_i32_1 = arith.constant 0 : i32
    return %c0_i32, %c0_i32_0 : i32, i32
  }
  func.func @transform_8(%arg0: i32) -> (i32, i32) {
    %c0_i32 = arith.constant 0 : i32
    %c0_i32_0 = arith.constant 0 : i32
    %c0_i32_1 = arith.constant 0 : i32
    return %c0_i32, %c0_i32_0 : i32, i32
  }
  func.func @transform_9(%arg0: i32) -> (i32, i32) {
    %c0_i32 = arith.constant 0 : i32
    %c0_i32_0 = arith.constant 0 : i32
    %c0_i32_1 = arith.constant 0 : i32
    return %c0_i32, %c0_i32_0 : i32, i32
  }
  func.func @transform_10(%arg0: i32) -> (i32, i32) {
    %c0_i32 = arith.constant 0 : i32
    %c0_i32_0 = arith.constant 0 : i32
    %c0_i32_1 = arith.constant 0 : i32
    return %c0_i32, %c0_i32_0 : i32, i32
  }
  func.func @transform_11(%arg0: i32) -> (i32, i32) {
    %c0_i32 = arith.constant 0 : i32
    %c0_i32_0 = arith.constant 0 : i32
    return %arg0, %c0_i32 : i32, i32
  }
}

</mosaic_0001>

<llo_original>
// kernel: ruber_unrefer_forward.1
$region0: #{ruber_unrefer_forward.1}
  #allocation0 [shape = 'u32[]', space=smem, size = 0x4, offset = 0x4, fixed_abs, tag = 'smem constant byte address 0x4 - core index']
  #allocation1 [shape = 'u32[144,128]{1,0:T(1,128)}', space=vmem, size = 0x12000, scoped, tag = 'internal scratch']
  #allocation2 [shape = 'f32[8,8,384]{2,1,0:T(8,128)}', space=vmem, size = 0x18000, scoped, tag = 'scratch operand']
  #allocation3 [shape = 'f32[1,1]{1,0:T(1,128)S(1)}', space=vmem, size = 0x200, scoped, tag = 'scoped memory for ruber_unrefer_forward.1']
  %s0 = inlined_call_operand.vmem [shape: f32[8,8,128], index: 0, kind: input, shape index: {}]
  %s1 = inlined_call_operand.vmem [shape: bf16[128,384], index: 1, kind: input, shape index: {}]
  %s2 = inlined_call_operand.vmem [shape: f32[1,384], index: 2, kind: input, shape index: {}]
  %s3 = inlined_call_operand.vmem [shape: bf16[128,256], index: 3, kind: input, shape index: {}]
  %s4 = inlined_call_operand.vmem [shape: bf16[128,128], index: 4, kind: input, shape index: {}]
  %s5 = inlined_call_operand.vmem [shape: f32[1,128], index: 5, kind: input, shape index: {}]
  %s6 = inlined_call_operand.vmem [shape: bf16[128,64], index: 6, kind: input, shape index: {}]
  %s7 = inlined_call_operand.vmem [shape: f32[1,32], index: 7, kind: input, shape index: {}]
  %s8 = inlined_call_operand.vmem [shape: f32[1,32], index: 8, kind: input, shape index: {}]
  %s9 = inlined_call_operand.vmem [shape: f32[1,32], index: 9, kind: input, shape index: {}]
  %s10 = inlined_call_operand.<no memory space> [shape: f32[1,1], index: 10, kind: input, shape index: {}]
  %s11 = inlined_call_operand.vmem [shape: f32[8,128], index: 11, kind: output, shape index: {}]
  %s12 = sld [smem:[#allocation0]]
  $region54: #{ruber_unrefer_forward.1} parent=0
    _
  %s14 = ssub.s32 1, %s12
  %s15 = scalar_select 0, %s14, %s12
  %v16 = vstv %s10
  %17 = vst [vmem:[#allocation3] sm:$0x1] %v16
  // Predicated region
  $region2: #{ruber_unrefer_forward.1} parent=0 // pred_check
    _
  $region3: #{ruber_unrefer_forward.1} parent=0 // pred_check_branch
    %19 = sbr.rel (0) target = $region5
  $region4: #{ruber_unrefer_forward.1} parent=0 // pred_region
    _
  $region5: #{ruber_unrefer_forward.1} parent=0 // pred_fallthru
    _
  // Predicated region
  $region6: #{ruber_unrefer_forward.1} parent=0 // pred_check
    _
  $region7: #{ruber_unrefer_forward.1} parent=0 // pred_check_branch
    %21 = sbr.rel (0) target = $region9
  $region8: #{ruber_unrefer_forward.1} parent=0 // pred_region
    _
  $region9: #{ruber_unrefer_forward.1} parent=0 // pred_fallthru
    _
  // Predicated region
  $region10: #{ruber_unrefer_forward.1} parent=0 // pred_check
    _
  $region11: #{ruber_unrefer_forward.1} parent=0 // pred_check_branch
    %23 = sbr.rel (0) target = $region13
  $region12: #{ruber_unrefer_forward.1} parent=0 // pred_region
    _
  $region13: #{ruber_unrefer_forward.1} parent=0 // pred_fallthru
    _
  // Predicated region
  $region14: #{ruber_unrefer_forward.1} parent=0 // pred_check
    _
  $region15: #{ruber_unrefer_forward.1} parent=0 // pred_check_branch
    %25 = sbr.rel (0) target = $region17
  $region16: #{ruber_unrefer_forward.1} parent=0 // pred_region
    _
  $region17: #{ruber_unrefer_forward.1} parent=0 // pred_fallthru
    _
  // Predicated region
  $region18: #{ruber_unrefer_forward.1} parent=0 // pred_check
    _
  $region19: #{ruber_unrefer_forward.1} parent=0 // pred_check_branch
    %27 = sbr.rel (0) target = $region21
  $region20: #{ruber_unrefer_forward.1} parent=0 // pred_region
    _
  $region21: #{ruber_unrefer_forward.1} parent=0 // pred_fallthru
    _
  // Predicated region
  $region22: #{ruber_unrefer_forward.1} parent=0 // pred_check
    _
  $region23: #{ruber_unrefer_forward.1} parent=0 // pred_check_branch
    %29 = sbr.rel (0) target = $region25
  $region24: #{ruber_unrefer_forward.1} parent=0 // pred_region
    _
  $region25: #{ruber_unrefer_forward.1} parent=0 // pred_fallthru
    _
  // Predicated region
  $region26: #{ruber_unrefer_forward.1} parent=0 // pred_check
    _
  $region27: #{ruber_unrefer_forward.1} parent=0 // pred_check_branch
    %31 = sbr.rel (0) target = $region29
  $region28: #{ruber_unrefer_forward.1} parent=0 // pred_region
    _
  $region29: #{ruber_unrefer_forward.1} parent=0 // pred_fallthru
    _
  // Predicated region
  $region30: #{ruber_unrefer_forward.1} parent=0 // pred_check
    _
  $region31: #{ruber_unrefer_forward.1} parent=0 // pred_check_branch
    %33 = sbr.rel (0) target = $region33
  $region32: #{ruber_unrefer_forward.1} parent=0 // pred_region
    _
  $region33: #{ruber_unrefer_forward.1} parent=0 // pred_fallthru
    _
  // Predicated region
  $region34: #{ruber_unrefer_forward.1} parent=0 // pred_check
    _
  $region35: #{ruber_unrefer_forward.1} parent=0 // pred_check_branch
    %35 = sbr.rel (0) target = $region37
  $region36: #{ruber_unrefer_forward.1} parent=0 // pred_region
    _
  $region37: #{ruber_unrefer_forward.1} parent=0 // pred_fallthru
    _
  // Predicated region
  $region38: #{ruber_unrefer_forward.1} parent=0 // pred_check
    _
  $region39: #{ruber_unrefer_forward.1} parent=0 // pred_check_branch
    %37 = sbr.rel (0) target = $region41
  $region40: #{ruber_unrefer_forward.1} parent=0 // pred_region
    _
  $region41: #{ruber_unrefer_forward.1} parent=0 // pred_fallthru
    _
  // Predicated region
  $region42: #{ruber_unrefer_forward.1} parent=0 // pred_check
    _
  $region43: #{ruber_unrefer_forward.1} parent=0 // pred_check_branch
    %39 = sbr.rel (0) target = $region45
  $region44: #{ruber_unrefer_forward.1} parent=0 // pred_region
    _
  $region45: #{ruber_unrefer_forward.1} parent=0 // pred_fallthru
    _
  %v41 = vld [vmem:[%s0] sm:$0xff]
  %v42 = vld [vmem:[%s0 + $0x8] sm:$0xff]
  %v43 = vld [vmem:[%s0 + $0x10] sm:$0xff]
  %v44 = vld [vmem:[%s0 + $0x18] sm:$0xff]
  %v45 = vld [vmem:[%s0 + $0x20] sm:$0xff]
  %v46 = vld [vmem:[%s0 + $0x28] sm:$0xff]
  %v47 = vld [vmem:[%s0 + $0x30] sm:$0xff]
  %v48 = vld [vmem:[%s0 + $0x38] sm:$0xff]
  %v49 = vpack.c.bf16 %v42, %v41
  %v50 = vpack.c.bf16 %v44, %v43
  %v51 = vpack.c.bf16 %v46, %v45
  %v52 = vpack.c.bf16 %v48, %v47
  %v53 = vld [vmem:[%s1] sm:$0xff]
  %v54 = vld [vmem:[%s1 + $0x8] sm:$0xf]
  %v55 = vld [vmem:[%s1 + $0xc] sm:$0xff]
  %v56 = vld [vmem:[%s1 + $0x14] sm:$0xf]
  %v57 = vld [vmem:[%s1 + $0x18] sm:$0xff]
  %v58 = vld [vmem:[%s1 + $0x20] sm:$0xf]
  %v59 = vld [vmem:[%s1 + $0x24] sm:$0xff]
  %v60 = vld [vmem:[%s1 + $0x2c] sm:$0xf]
  %v61 = vld [vmem:[%s1 + $0x30] sm:$0xff]
  %v62 = vld [vmem:[%s1 + $0x38] sm:$0xf]
  %v63 = vld [vmem:[%s1 + $0x3c] sm:$0xff]
  %v64 = vld [vmem:[%s1 + $0x44] sm:$0xf]
  %v65 = vld [vmem:[%s1 + $0x48] sm:$0xff]
  %v66 = vld [vmem:[%s1 + $0x50] sm:$0xf]
  %v67 = vld [vmem:[%s1 + $0x54] sm:$0xff]
  %v68 = vld [vmem:[%s1 + $0x5c] sm:$0xf]
  %v69 = vld [vmem:[%s1 + $0x60] sm:$0xff]
  %v70 = vld [vmem:[%s1 + $0x68] sm:$0xf]
  %v71 = vld [vmem:[%s1 + $0x6c] sm:$0xff]
  %v72 = vld [vmem:[%s1 + $0x74] sm:$0xf]
  %v73 = vld [vmem:[%s1 + $0x78] sm:$0xff]
  %v74 = vld [vmem:[%s1 + $0x80] sm:$0xf]
  %v75 = vld [vmem:[%s1 + $0x84] sm:$0xff]
  %v76 = vld [vmem:[%s1 + $0x8c] sm:$0xf]
  %v77 = vld [vmem:[%s1 + $0x90] sm:$0xff]
  %v78 = vld [vmem:[%s1 + $0x98] sm:$0xf]
  %v79 = vld [vmem:[%s1 + $0x9c] sm:$0xff]
  %v80 = vld [vmem:[%s1 + $0xa4] sm:$0xf]
  %v81 = vld [vmem:[%s1 + $0xa8] sm:$0xff]
  %v82 = vld [vmem:[%s1 + $0xb0] sm:$0xf]
  %v83 = vld [vmem:[%s1 + $0xb4] sm:$0xff]
  %v84 = vld [vmem:[%s1 + $0xbc] sm:$0xf]
  %v85 = vld [vmem:[%s2] sm:$0x7]
  %v87 = vlaneseq
  %v88 = vshrl.u32 %v87, 7
  %v89 = vsub.s32 0, %v88
  %v90 = vrot.slane %v85, %v89
  %v91 = vlaneseq
  %v92 = vshrl.u32 %v91, 7
  %v93 = vsub.s32 1, %v92
  %v94 = vrot.slane %v85, %v93
  %v95 = vlaneseq
  %v96 = vshrl.u32 %v95, 7
  %v97 = vsub.s32 2, %v96
  %v98 = vrot.slane %v85, %v97
  %v134 = vunpack.c.l.b16 %v53
  %v135 = vunpack.c.h.b16 %v53
  %v136 = vunpack.c.l.b16 %v54
  %v137 = vunpack.c.l.b16 %v55
  %v138 = vunpack.c.h.b16 %v55
  %v139 = vunpack.c.l.b16 %v56
  %v140 = vunpack.c.l.b16 %v57
  %v141 = vunpack.c.h.b16 %v57
  %v142 = vunpack.c.l.b16 %v58
  %v143 = vunpack.c.l.b16 %v59
  %v144 = vunpack.c.h.b16 %v59
  %v145 = vunpack.c.l.b16 %v60
  %v146 = vunpack.c.l.b16 %v61
  %v147 = vunpack.c.h.b16 %v61
  %v148 = vunpack.c.l.b16 %v62
  %v149 = vunpack.c.l.b16 %v63
  %v150 = vunpack.c.h.b16 %v63
  %v151 = vunpack.c.l.b16 %v64
  %v152 = vunpack.c.l.b16 %v65
  %v153 = vunpack.c.h.b16 %v65
  %v154 = vunpack.c.l.b16 %v66
  %v155 = vunpack.c.l.b16 %v67
  %v156 = vunpack.c.h.b16 %v67
  %v157 = vunpack.c.l.b16 %v68
  %v158 = vunpack.c.l.b16 %v69
  %v159 = vunpack.c.h.b16 %v69
  %v160 = vunpack.c.l.b16 %v70
  %v161 = vunpack.c.l.b16 %v71
  %v162 = vunpack.c.h.b16 %v71
  %v163 = vunpack.c.l.b16 %v72
  %v164 = vunpack.c.l.b16 %v73
  %v165 = vunpack.c.h.b16 %v73
  %v166 = vunpack.c.l.b16 %v74
  %v167 = vunpack.c.l.b16 %v75
  %v168 = vunpack.c.h.b16 %v75
  %v169 = vunpack.c.l.b16 %v76
  %v170 = vunpack.c.l.b16 %v77
  %v171 = vunpack.c.h.b16 %v77
  %v172 = vunpack.c.l.b16 %v78
  %v173 = vunpack.c.l.b16 %v79
  %v174 = vunpack.c.h.b16 %v79
  %v175 = vunpack.c.l.b16 %v80
  %v176 = vunpack.c.l.b16 %v81
  %v177 = vunpack.c.h.b16 %v81
  %v178 = vunpack.c.l.b16 %v82
  %v179 = vunpack.c.l.b16 %v83
  %v180 = vunpack.c.h.b16 %v83
  %v181 = vunpack.c.l.b16 %v84
  %v182 = vpack.c.b16 %v137, %v134
  %v183 = vpack.c.b16 %v138, %v135
  %v184 = vpack.c.b16 %v139, %v136
  %v185 = vpack.c.b16 %v143, %v140
  %v186 = vpack.c.b16 %v144, %v141
  %v187 = vpack.c.b16 %v145, %v142
  %v188 = vpack.c.b16 %v149, %v146
  %v189 = vpack.c.b16 %v150, %v147
  %v190 = vpack.c.b16 %v151, %v148
  %v191 = vpack.c.b16 %v155, %v152
  %v192 = vpack.c.b16 %v156, %v153
  %v193 = vpack.c.b16 %v157, %v154
  %v194 = vpack.c.b16 %v161, %v158
  %v195 = vpack.c.b16 %v162, %v159
  %v196 = vpack.c.b16 %v163, %v160
  %v197 = vpack.c.b16 %v167, %v164
  %v198 = vpack.c.b16 %v168, %v165
  %v199 = vpack.c.b16 %v169, %v166
  %v200 = vpack.c.b16 %v173, %v170
  %v201 = vpack.c.b16 %v174, %v171
  %v202 = vpack.c.b16 %v175, %v172
  %v203 = vpack.c.b16 %v179, %v176
  %v204 = vpack.c.b16 %v180, %v177
  %v205 = vpack.c.b16 %v181, %v178
  %230 = vmatprep.subr.bf16.mxu0 %v183
  %231 = vmatpush1.bf16.msra.mxu0 %v182
  %232 = vmatprep.subr.bf16.mxu0 %v186
  %233 = vmatpush1.bf16.msra.mxu0 %v185
  %234 = vmatprep.subr.bf16.mxu0 %v189
  %235 = vmatpush1.bf16.msra.mxu0 %v188
  %236 = vmatprep.subr.bf16.mxu0 %v192
  %237 = vmatpush1.bf16.msra.mxu0 %v191
  %238 = vmatprep.subr.bf16.mxu0 %v195
  %239 = vmatpush1.bf16.msra.mxu0 %v194
  %240 = vmatprep.subr.bf16.mxu0 %v198
  %241 = vmatpush1.bf16.msra.mxu0 %v197
  %242 = vmatprep.subr.bf16.mxu0 %v201
  %243 = vmatpush1.bf16.msra.mxu0 %v200
  %244 = vmatprep.subr.bf16.mxu0 %v204
  %245 = vmatpush1.bf16.msra.mxu0 %v203
  %246 = vmatprep.subr.bf16.mxu0 0
  %247 = vmatpush1.bf16.msra.mxu0 0
  %248 = vmatprep.subr.bf16.mxu0 0
  %249 = vmatpush1.bf16.msra.mxu0 0
  %250 = vmatprep.subr.bf16.mxu0 0
  %251 = vmatpush1.bf16.msra.mxu0 0
  %252 = vmatprep.subr.bf16.mxu0 0
  %253 = vmatpush1.bf16.msra.mxu0 0
  %254 = vmatprep.subr.bf16.mxu0 0
  %255 = vmatpush1.bf16.msra.mxu0 0
  %256 = vmatprep.subr.bf16.mxu0 0
  %257 = vmatpush1.bf16.msra.mxu0 0
  %258 = vmatprep.subr.bf16.mxu0 0
  %259 = vmatpush1.bf16.msra.mxu0 0
  %260 = vmatprep.subr.bf16.mxu0 0
  %261 = vmatpush1.bf16.msra.mxu0 0
  %262 = vmatprep.mubr.bf16.mxu0 0
  %263 = vmatmul.mubr.bf16.gmra.mrb[0].mxu0 %v49
  %v264 = vpop.f32.mrb[0].mxu0
  %v265 = vadd.f32 %v90, %v264
  %v266 = vpop.f32.mrb[0].mxu0
  %v267 = vadd.f32 %v94, %v266
  %v268 = vpop.f32.mrb[0].mxu0
  %v269 = vadd.f32 %v90, %v268
  %v270 = vpop.f32.mrb[0].mxu0
  %v271 = vadd.f32 %v94, %v270
  %272 = vmatprep.mubr.bf16.mxu0 0
  %273 = vmatmul.mubr.bf16.gmra.mrb[0].mxu0 %v50
  %v274 = vpop.f32.mrb[0].mxu0
  %v275 = vadd.f32 %v90, %v274
  %v276 = vpop.f32.mrb[0].mxu0
  %v277 = vadd.f32 %v94, %v276
  %v278 = vpop.f32.mrb[0].mxu0
  %v279 = vadd.f32 %v90, %v278
  %v280 = vpop.f32.mrb[0].mxu0
  %v281 = vadd.f32 %v94, %v280
  %282 = vmatprep.mubr.bf16.mxu0 0
  %283 = vmatmul.mubr.bf16.gmra.mrb[0].mxu0 %v51
  %v284 = vpop.f32.mrb[0].mxu0
  %v285 = vadd.f32 %v90, %v284
  %v286 = vpop.f32.mrb[0].mxu0
  %v287 = vadd.f32 %v94, %v286
  %v288 = vpop.f32.mrb[0].mxu0
  %v289 = vadd.f32 %v90, %v288
  %v290 = vpop.f32.mrb[0].mxu0
  %v291 = vadd.f32 %v94, %v290
  %292 = vmatprep.mubr.bf16.mxu0 0
  %293 = vmatmul.mubr.bf16.gmra.mrb[0].mxu0 %v52
  %v294 = vpop.f32.mrb[0].mxu0
  %v295 = vadd.f32 %v90, %v294
  %v296 = vpop.f32.mrb[0].mxu0
  %v297 = vadd.f32 %v94, %v296
  %v298 = vpop.f32.mrb[0].mxu0
  %v299 = vadd.f32 %v90, %v298
  %v300 = vpop.f32.mrb[0].mxu0
  %v301 = vadd.f32 %v94, %v300
  %302 = vdwg.mxu0
  %303 = vmatprep.subr.bf16.mxu0 0
  %304 = vmatpush1.bf16.msra.mxu0 %v184
  %305 = vmatprep.subr.bf16.mxu0 0
  %306 = vmatpush1.bf16.msra.mxu0 %v187
  %307 = vmatprep.subr.bf16.mxu0 0
  %308 = vmatpush1.bf16.msra.mxu0 %v190
  %309 = vmatprep.subr.bf16.mxu0 0
  %310 = vmatpush1.bf16.msra.mxu0 %v193
  %311 = vmatprep.subr.bf16.mxu0 0
  %312 = vmatpush1.bf16.msra.mxu0 %v196
  %313 = vmatprep.subr.bf16.mxu0 0
  %314 = vmatpush1.bf16.msra.mxu0 %v199
  %315 = vmatprep.subr.bf16.mxu0 0
  %316 = vmatpush1.bf16.msra.mxu0 %v202
  %317 = vmatprep.subr.bf16.mxu0 0
  %318 = vmatpush1.bf16.msra.mxu0 %v205
  %319 = vmatprep.subr.bf16.mxu0 0
  %320 = vmatpush1.bf16.msra.mxu0 0
  %321 = vmatprep.subr.bf16.mxu0 0
  %322 = vmatpush1.bf16.msra.mxu0 0
  %323 = vmatprep.subr.bf16.mxu0 0
  %324 = vmatpush1.bf16.msra.mxu0 0
  %325 = vmatprep.subr.bf16.mxu0 0
  %326 = vmatpush1.bf16.msra.mxu0 0
  %327 = vmatprep.subr.bf16.mxu0 0
  %328 = vmatpush1.bf16.msra.mxu0 0
  %329 = vmatprep.subr.bf16.mxu0 0
  %330 = vmatpush1.bf16.msra.mxu0 0
  %331 = vmatprep.subr.bf16.mxu0 0
  %332 = vmatpush1.bf16.msra.mxu0 0
  %333 = vmatprep.subr.bf16.mxu0 0
  %334 = vmatpush1.bf16.msra.mxu0 0
  %335 = vmatprep.mubr.bf16.mxu0 0
  %336 = vmatmul.mubr.bf16.gmra.mrb[0].mxu0 %v49
  %v337 = vpop.f32.mrb[0].mxu0
  %v338 = vadd.f32 %v98, %v337
  %v339 = vpop.f32.mrb[0].mxu0
  %v340 = vpop.f32.mrb[0].mxu0
  %v341 = vadd.f32 %v98, %v340
  %v342 = vpop.f32.mrb[0].mxu0
  %343 = vmatprep.mubr.bf16.mxu0 0
  %344 = vmatmul.mubr.bf16.gmra.mrb[0].mxu0 %v50
  %v345 = vpop.f32.mrb[0].mxu0
  %v346 = vadd.f32 %v98, %v345
  %v347 = vpop.f32.mrb[0].mxu0
  %v348 = vpop.f32.mrb[0].mxu0
  %v349 = vadd.f32 %v98, %v348
  %v350 = vpop.f32.mrb[0].mxu0
  %351 = vmatprep.mubr.bf16.mxu0 0
  %352 = vmatmul.mubr.bf16.gmra.mrb[0].mxu0 %v51
  %v353 = vpop.f32.mrb[0].mxu0
  %v354 = vadd.f32 %v98, %v353
  %v355 = vpop.f32.mrb[0].mxu0
  %v356 = vpop.f32.mrb[0].mxu0
  %v357 = vadd.f32 %v98, %v356
  %v358 = vpop.f32.mrb[0].mxu0
  %359 = vmatprep.mubr.bf16.mxu0 0
  %360 = vmatmul.mubr.bf16.gmra.mrb[0].mxu0 %v52
  %v361 = vpop.f32.mrb[0].mxu0
  %v362 = vadd.f32 %v98, %v361
  %v363 = vpop.f32.mrb[0].mxu0
  %v364 = vpop.f32.mrb[0].mxu0
  %v365 = vadd.f32 %v98, %v364
  %v366 = vpop.f32.mrb[0].mxu0
  %367 = vdwg.mxu0
  %368 = vst [vmem:[#allocation2] sm:$0xff] %v265
  %369 = vst [vmem:[#allocation2 + $0x8] sm:$0xff] %v267
  %370 = vst [vmem:[#allocation2 + $0x10] sm:$0xff] %v338
  %371 = vst [vmem:[#allocation2 + $0x18] sm:$0xff] %v269
  %372 = vst [vmem:[#allocation2 + $0x20] sm:$0xff] %v271
  %373 = vst [vmem:[#allocation2 + $0x28] sm:$0xff] %v341
  %374 = vst [vmem:[#allocation2 + $0x30] sm:$0xff] %v275
  %375 = vst [vmem:[#allocation2 + $0x38] sm:$0xff] %v277
  %376 = vst [vmem:[#allocation2 + $0x40] sm:$0xff] %v346
  %377 = vst [vmem:[#allocation2 + $0x48] sm:$0xff] %v279
  %378 = vst [vmem:[#allocation2 + $0x50] sm:$0xff] %v281
  %379 = vst [vmem:[#allocation2 + $0x58] sm:$0xff] %v349
  %380 = vst [vmem:[#allocation2 + $0x60] sm:$0xff] %v285
  %381 = vst [vmem:[#allocation2 + $0x68] sm:$0xff] %v287
  %382 = vst [vmem:[#allocation2 + $0x70] sm:$0xff] %v354
  %383 = vst [vmem:[#allocation2 + $0x78] sm:$0xff] %v289
  %384 = vst [vmem:[#allocation2 + $0x80] sm:$0xff] %v291
  %385 = vst [vmem:[#allocation2 + $0x88] sm:$0xff] %v357
  %386 = vst [vmem:[#allocation2 + $0x90] sm:$0xff] %v295
  %387 = vst [vmem:[#allocation2 + $0x98] sm:$0xff] %v297
  %388 = vst [vmem:[#allocation2 + $0xa0] sm:$0xff] %v362
  %389 = vst [vmem:[#allocation2 + $0xa8] sm:$0xff] %v299
  %390 = vst [vmem:[#allocation2 + $0xb0] sm:$0xff] %v301
  %391 = vst [vmem:[#allocation2 + $0xb8] sm:$0xff] %v365
  %v392 = vld [vmem:[%s3] sm:$0xff]
  %v393 = vld [vmem:[%s3 + $0x8] sm:$0xff]
  %v394 = vld [vmem:[%s3 + $0x10] sm:$0xff]
  %v395 = vld [vmem:[%s3 + $0x18] sm:$0xff]
  %v396 = vld [vmem:[%s3 + $0x20] sm:$0xff]
  %v397 = vld [vmem:[%s3 + $0x28] sm:$0xff]
  %v398 = vld [vmem:[%s3 + $0x30] sm:$0xff]
  %v399 = vld [vmem:[%s3 + $0x38] sm:$0xff]
  %v400 = vld [vmem:[%s3 + $0x40] sm:$0xff]
  %v401 = vld [vmem:[%s3 + $0x48] sm:$0xff]
  %v402 = vld [vmem:[%s3 + $0x50] sm:$0xff]
  %v403 = vld [vmem:[%s3 + $0x58] sm:$0xff]
  %v404 = vld [vmem:[%s3 + $0x60] sm:$0xff]
  %v405 = vld [vmem:[%s3 + $0x68] sm:$0xff]
  %v406 = vld [vmem:[%s3 + $0x70] sm:$0xff]
  %v407 = vld [vmem:[%s3 + $0x78] sm:$0xff]
  %v408 = vld [vmem:[%s4] sm:$0xf]
  %v409 = vld [vmem:[%s4 + $0x4] sm:$0xf]
  %v410 = vld [vmem:[%s4 + $0x8] sm:$0xf]
  %v411 = vld [vmem:[%s4 + $0xc] sm:$0xf]
  %v412 = vld [vmem:[%s4 + $0x10] sm:$0xf]
  %v413 = vld [vmem:[%s4 + $0x14] sm:$0xf]
  %v414 = vld [vmem:[%s4 + $0x18] sm:$0xf]
  %v415 = vld [vmem:[%s4 + $0x1c] sm:$0xf]
  %v416 = vld [vmem:[%s4 + $0x20] sm:$0xf]
  %v417 = vld [vmem:[%s4 + $0x24] sm:$0xf]
  %v418 = vld [vmem:[%s4 + $0x28] sm:$0xf]
  %v419 = vld [vmem:[%s4 + $0x2c] sm:$0xf]
  %v420 = vld [vmem:[%s4 + $0x30] sm:$0xf]
  %v421 = vld [vmem:[%s4 + $0x34] sm:$0xf]
  %v422 = vld [vmem:[%s4 + $0x38] sm:$0xf]
  %v423 = vld [vmem:[%s4 + $0x3c] sm:$0xf]
  %v424 = vld [vmem:[%s5] sm:$0x1]
  %v426 = vlaneseq
  %v427 = vshrl.u32 %v426, 7
  %v428 = vsub.s32 0, %v427
  %v429 = vrot.slane %v424, %v428
  %v431 = vlaneseq
  %v432 = vand.u32 %v431, 127
  %vm433 = vcmp.lt.s32.totalorder %v432, 64
  %v434 = vld [vmem:[#allocation2] sm:$0xff]
  %v435 = vld [vmem:[#allocation2 + $0x8] sm:$0xff]
  %v436 = vld [vmem:[#allocation2 + $0x10] sm:$0xff]
  %v453 = vunpack.c.l.b16 %v392
  %v454 = vunpack.c.h.b16 %v392
  %v455 = vunpack.c.l.b16 %v393
  %v456 = vunpack.c.h.b16 %v393
  %v457 = vunpack.c.l.b16 %v394
  %v458 = vunpack.c.h.b16 %v394
  %v459 = vunpack.c.l.b16 %v395
  %v460 = vunpack.c.h.b16 %v395
  %v461 = vunpack.c.l.b16 %v396
  %v462 = vunpack.c.h.b16 %v396
  %v463 = vunpack.c.l.b16 %v397
  %v464 = vunpack.c.h.b16 %v397
  %v465 = vunpack.c.l.b16 %v398
  %v466 = vunpack.c.h.b16 %v398
  %v467 = vunpack.c.l.b16 %v399
  %v468 = vunpack.c.h.b16 %v399
  %v469 = vunpack.c.l.b16 %v400
  %v470 = vunpack.c.h.b16 %v400
  %v471 = vunpack.c.l.b16 %v401
  %v472 = vunpack.c.h.b16 %v401
  %v473 = vunpack.c.l.b16 %v402
  %v474 = vunpack.c.h.b16 %v402
  %v475 = vunpack.c.l.b16 %v403
  %v476 = vunpack.c.h.b16 %v403
  %v477 = vunpack.c.l.b16 %v404
  %v478 = vunpack.c.h.b16 %v404
  %v479 = vunpack.c.l.b16 %v405
  %v480 = vunpack.c.h.b16 %v405
  %v481 = vunpack.c.l.b16 %v406
  %v482 = vunpack.c.h.b16 %v406
  %v483 = vunpack.c.l.b16 %v407
  %v484 = vunpack.c.h.b16 %v407
  %v485 = vpack.c.b16 %v455, %v453
  %v486 = vpack.c.b16 %v456, %v454
  %v487 = vpack.c.b16 %v459, %v457
  %v488 = vpack.c.b16 %v460, %v458
  %v489 = vpack.c.b16 %v463, %v461
  %v490 = vpack.c.b16 %v464, %v462
  %v491 = vpack.c.b16 %v467, %v465
  %v492 = vpack.c.b16 %v468, %v466
  %v493 = vpack.c.b16 %v471, %v469
  %v494 = vpack.c.b16 %v472, %v470
  %v495 = vpack.c.b16 %v475, %v473
  %v496 = vpack.c.b16 %v476, %v474
  %v497 = vpack.c.b16 %v479, %v477
  %v498 = vpack.c.b16 %v480, %v478
  %v499 = vpack.c.b16 %v483, %v481
  %v500 = vpack.c.b16 %v484, %v482
  %517 = vmatprep.subr.bf16.mxu0 %v486
  %518 = vmatpush1.bf16.msra.mxu0 %v485
  %519 = vmatprep.subr.bf16.mxu0 %v488
  %520 = vmatpush1.bf16.msra.mxu0 %v487
  %521 = vmatprep.subr.bf16.mxu0 %v490
  %522 = vmatpush1.bf16.msra.mxu0 %v489
  %523 = vmatprep.subr.bf16.mxu0 %v492
  %524 = vmatpush1.bf16.msra.mxu0 %v491
  %525 = vmatprep.subr.bf16.mxu0 %v494
  %526 = vmatpush1.bf16.msra.mxu0 %v493
  %527 = vmatprep.subr.bf16.mxu0 %v496
  %528 = vmatpush1.bf16.msra.mxu0 %v495
  %529 = vmatprep.subr.bf16.mxu0 %v498
  %530 = vmatpush1.bf16.msra.mxu0 %v497
  %531 = vmatprep.subr.bf16.mxu0 %v500
  %532 = vmatpush1.bf16.msra.mxu0 %v499
  %533 = vmatprep.subr.bf16.mxu0 0
  %534 = vmatpush1.bf16.msra.mxu0 0
  %535 = vmatprep.subr.bf16.mxu0 0
  %536 = vmatpush1.bf16.msra.mxu0 0
  %537 = vmatprep.subr.bf16.mxu0 0
  %538 = vmatpush1.bf16.msra.mxu0 0
  %539 = vmatprep.subr.bf16.mxu0 0
  %540 = vmatpush1.bf16.msra.mxu0 0
  %541 = vmatprep.subr.bf16.mxu0 0
  %542 = vmatpush1.bf16.msra.mxu0 0
  %543 = vmatprep.subr.bf16.mxu0 0
  %544 = vmatpush1.bf16.msra.mxu0 0
  %545 = vmatprep.subr.bf16.mxu0 0
  %546 = vmatpush1.bf16.msra.mxu0 0
  %547 = vmatprep.subr.bf16.mxu0 0
  %548 = vmatpush1.bf16.msra.mxu0 0
  %549 = vmatprep.mubr.bf16.mxu0 0
  %550 = vmatmul.mubr.bf16.gmra.mrb[0].mxu0 0
  %v551 = vpop.f32.mrb[0].mxu0
  %v552 = vadd.f32 0.0, %v551
  %v553 = vpop.f32.mrb[0].mxu0
  %v554 = vadd.f32 0.0, %v553
  %v555 = vpop.f32.mrb[0].mxu0
  %v556 = vpop.f32.mrb[0].mxu0
  %557 = vdwg.mxu0
  %v558 = vadd.f32 %v434, %v552
  %v559 = vxor.u32 %v558, 2147483648
  %v560 = vmul.f32 %v559, 1.442695
  %v561 = vpow.pop %v560
  %v562 = vadd.f32 %v561, 1.0
  %v563 = vrcp.pop %v562
  %v564 = vmul.f32 1.0, %v563
  %v565 = vadd.f32 %v435, %v554
  %v566 = vxor.u32 %v565, 2147483648
  %v567 = vmul.f32 %v566, 1.442695
  %v568 = vpow.pop %v567
  %v569 = vadd.f32 %v568, 1.0
  %v570 = vrcp.pop %v569
  %v571 = vmul.f32 1.0, %v570
  %v588 = vunpack.c.l.b16 %v408
  %v589 = vunpack.c.l.b16 %v409
  %v590 = vunpack.c.l.b16 %v410
  %v591 = vunpack.c.l.b16 %v411
  %v592 = vunpack.c.l.b16 %v412
  %v593 = vunpack.c.l.b16 %v413
  %v594 = vunpack.c.l.b16 %v414
  %v595 = vunpack.c.l.b16 %v415
  %v596 = vunpack.c.l.b16 %v416
  %v597 = vunpack.c.l.b16 %v417
  %v598 = vunpack.c.l.b16 %v418
  %v599 = vunpack.c.l.b16 %v419
  %v600 = vunpack.c.l.b16 %v420
  %v601 = vunpack.c.l.b16 %v421
  %v602 = vunpack.c.l.b16 %v422
  %v603 = vunpack.c.l.b16 %v423
  %v604 = vpack.c.b16 %v589, %v588
  %v605 = vpack.c.b16 %v591, %v590
  %v606 = vpack.c.b16 %v593, %v592
  %v607 = vpack.c.b16 %v595, %v594
  %v608 = vpack.c.b16 %v597, %v596
  %v609 = vpack.c.b16 %v599, %v598
  %v610 = vpack.c.b16 %v601, %v600
  %v611 = vpack.c.b16 %v603, %v602
  %620 = vmatprep.subr.bf16.mxu0 0
  %621 = vmatpush1.bf16.msra.mxu0 %v604
  %622 = vmatprep.subr.bf16.mxu0 0
  %623 = vmatpush1.bf16.msra.mxu0 %v605
  %624 = vmatprep.subr.bf16.mxu0 0
  %625 = vmatpush1.bf16.msra.mxu0 %v606
  %626 = vmatprep.subr.bf16.mxu0 0
  %627 = vmatpush1.bf16.msra.mxu0 %v607
  %628 = vmatprep.subr.bf16.mxu0 0
  %629 = vmatpush1.bf16.msra.mxu0 %v608
  %630 = vmatprep.subr.bf16.mxu0 0
  %631 = vmatpush1.bf16.msra.mxu0 %v609
  %632 = vmatprep.subr.bf16.mxu0 0
  %633 = vmatpush1.bf16.msra.mxu0 %v610
  %634 = vmatprep.subr.bf16.mxu0 0
  %635 = vmatpush1.bf16.msra.mxu0 %v611
  %636 = vmatprep.subr.bf16.mxu0 0
  %637 = vmatpush1.bf16.msra.mxu0 0
  %638 = vmatprep.subr.bf16.mxu0 0
  %639 = vmatpush1.bf16.msra.mxu0 0
  %640 = vmatprep.subr.bf16.mxu0 0
  %641 = vmatpush1.bf16.msra.mxu0 0
  %642 = vmatprep.subr.bf16.mxu0 0
  %643 = vmatpush1.bf16.msra.mxu0 0
  %644 = vmatprep.subr.bf16.mxu0 0
  %645 = vmatpush1.bf16.msra.mxu0 0
  %646 = vmatprep.subr.bf16.mxu0 0
  %647 = vmatpush1.bf16.msra.mxu0 0
  %648 = vmatprep.subr.bf16.mxu0 0
  %649 = vmatpush1.bf16.msra.mxu0 0
  %650 = vmatprep.subr.bf16.mxu0 0
  %651 = vmatpush1.bf16.msra.mxu0 0
  %652 = vmatprep.mubr.bf16.mxu0 0
  %653 = vmatmul.mubr.bf16.gmra.mrb[0].mxu0 0
  %v654 = vpop.f32.mrb[0].mxu0
  %v655 = vadd.f32 %v429, %v654
  %v656 = vpop.f32.mrb[0].mxu0
  %v657 = vpop.f32.mrb[0].mxu0
  %v658 = vpop.f32.mrb[0].mxu0
  %659 = vdwg.mxu0
  %v660 = vmul.f32 %v564, %v655
  %v661 = vadd.f32 %v436, %v660
  %v662 = vtanh.pop %v661
  %v663 = vsub.f32 1.0, %v571
  %v664 = vmul.f32 %v663, %v662
  %v665 = vmul.f32 %v571, 0.0
  %v666 = vadd.f32 %v664, %v665
  %s667 = scalar_lea.vmem [#allocation2], 24
  %v668 = vld [vmem:[%s667] sm:$0xff]
  %v669 = vld [vmem:[%s667 + $0x8] sm:$0xff]
  %v670 = vld [vmem:[%s667 + $0x10] sm:$0xff]
  %v671 = vpack.c.bf16 %v666, %v666
  %672 = vmatprep.subr.bf16.mxu0 %v486
  %673 = vmatpush1.bf16.msra.mxu0 %v485
  %674 = vmatprep.subr.bf16.mxu0 %v488
  %675 = vmatpush1.bf16.msra.mxu0 %v487
  %676 = vmatprep.subr.bf16.mxu0 %v490
  %677 = vmatpush1.bf16.msra.mxu0 %v489
  %678 = vmatprep.subr.bf16.mxu0 %v492
  %679 = vmatpush1.bf16.msra.mxu0 %v491
  %680 = vmatprep.subr.bf16.mxu0 %v494
  %681 = vmatpush1.bf16.msra.mxu0 %v493
  %682 = vmatprep.subr.bf16.mxu0 %v496
  %683 = vmatpush1.bf16.msra.mxu0 %v495
  %684 = vmatprep.subr.bf16.mxu0 %v498
  %685 = vmatpush1.bf16.msra.mxu0 %v497
  %686 = vmatprep.subr.bf16.mxu0 %v500
  %687 = vmatpush1.bf16.msra.mxu0 %v499
  %688 = vmatprep.subr.bf16.mxu0 0
  %689 = vmatpush1.bf16.msra.mxu0 0
  %690 = vmatprep.subr.bf16.mxu0 0
  %691 = vmatpush1.bf16.msra.mxu0 0
  %692 = vmatprep.subr.bf16.mxu0 0
  %693 = vmatpush1.bf16.msra.mxu0 0
  %694 = vmatprep.subr.bf16.mxu0 0
  %695 = vmatpush1.bf16.msra.mxu0 0
  %696 = vmatprep.subr.bf16.mxu0 0
  %697 = vmatpush1.bf16.msra.mxu0 0
  %698 = vmatprep.subr.bf16.mxu0 0
  %699 = vmatpush1.bf16.msra.mxu0 0
  %700 = vmatprep.subr.bf16.mxu0 0
  %701 = vmatpush1.bf16.msra.mxu0 0
  %702 = vmatprep.subr.bf16.mxu0 0
  %703 = vmatpush1.bf16.msra.mxu0 0
  %704 = vmatprep.mubr.bf16.mxu0 0
  %705 = vmatmul.mubr.bf16.gmra.mrb[0].mxu0 %v671
  %v706 = vpop.f32.mrb[0].mxu0
  %v707 = vadd.f32 0.0, %v706
  %v708 = vpop.f32.mrb[0].mxu0
  %v709 = vadd.f32 0.0, %v708
  %v710 = vpop.f32.mrb[0].mxu0
  %v711 = vpop.f32.mrb[0].mxu0
  %712 = vdwg.mxu0
  %v713 = vadd.f32 %v668, %v707
  %v714 = vxor.u32 %v713, 2147483648
  %v715 = vmul.f32 %v714, 1.442695
  %v716 = vpow.pop %v715
  %v717 = vadd.f32 %v716, 1.0
  %v718 = vrcp.pop %v717
  %v719 = vmul.f32 1.0, %v718
  %v720 = vadd.f32 %v669, %v709
  %v721 = vxor.u32 %v720, 2147483648
  %v722 = vmul.f32 %v721, 1.442695
  %v723 = vpow.pop %v722
  %v724 = vadd.f32 %v723, 1.0
  %v725 = vrcp.pop %v724
  %v726 = vmul.f32 1.0, %v725
  %727 = vmatprep.subr.bf16.mxu0 0
  %728 = vmatpush1.bf16.msra.mxu0 %v604
  %729 = vmatprep.subr.bf16.mxu0 0
  %730 = vmatpush1.bf16.msra.mxu0 %v605
  %731 = vmatprep.subr.bf16.mxu0 0
  %732 = vmatpush1.bf16.msra.mxu0 %v606
  %733 = vmatprep.subr.bf16.mxu0 0
  %734 = vmatpush1.bf16.msra.mxu0 %v607
  %735 = vmatprep.subr.bf16.mxu0 0
  %736 = vmatpush1.bf16.msra.mxu0 %v608
  %737 = vmatprep.subr.bf16.mxu0 0
  %738 = vmatpush1.bf16.msra.mxu0 %v609
  %739 = vmatprep.subr.bf16.mxu0 0
  %740 = vmatpush1.bf16.msra.mxu0 %v610
  %741 = vmatprep.subr.bf16.mxu0 0
  %742 = vmatpush1.bf16.msra.mxu0 %v611
  %743 = vmatprep.subr.bf16.mxu0 0
  %744 = vmatpush1.bf16.msra.mxu0 0
  %745 = vmatprep.subr.bf16.mxu0 0
  %746 = vmatpush1.bf16.msra.mxu0 0
  %747 = vmatprep.subr.bf16.mxu0 0
  %748 = vmatpush1.bf16.msra.mxu0 0
  %749 = vmatprep.subr.bf16.mxu0 0
  %750 = vmatpush1.bf16.msra.mxu0 0
  %751 = vmatprep.subr.bf16.mxu0 0
  %752 = vmatpush1.bf16.msra.mxu0 0
  %753 = vmatprep.subr.bf16.mxu0 0
  %754 = vmatpush1.bf16.msra.mxu0 0
  %755 = vmatprep.subr.bf16.mxu0 0
  %756 = vmatpush1.bf16.msra.mxu0 0
  %757 = vmatprep.subr.bf16.mxu0 0
  %758 = vmatpush1.bf16.msra.mxu0 0
  %759 = vmatprep.mubr.bf16.mxu0 0
  %760 = vmatmul.mubr.bf16.gmra.mrb[0].mxu0 %v671
  %v761 = vpop.f32.mrb[0].mxu0
  %v762 = vadd.f32 %v429, %v761
  %v763 = vpop.f32.mrb[0].mxu0
  %v764 = vpop.f32.mrb[0].mxu0
  %v765 = vpop.f32.mrb[0].mxu0
  %766 = vdwg.mxu0
  %v767 = vmul.f32 %v719, %v762
  %v768 = vadd.f32 %v670, %v767
  %v769 = vtanh.pop %v768
  %v770 = vsub.f32 1.0, %v726
  %v771 = vmul.f32 %v770, %v769
  %v772 = vmul.f32 %v726, %v666
  %v773 = vadd.f32 %v771, %v772
  %s774 = scalar_lea.vmem [#allocation2], 48
  %v775 = vld [vmem:[%s774] sm:$0xff]
  %v776 = vld [vmem:[%s774 + $0x8] sm:$0xff]
  %v777 = vld [vmem:[%s774 + $0x10] sm:$0xff]
  %v778 = vpack.c.bf16 %v773, %v773
  %779 = vmatprep.subr.bf16.mxu0 %v486
  %780 = vmatpush1.bf16.msra.mxu0 %v485
  %781 = vmatprep.subr.bf16.mxu0 %v488
  %782 = vmatpush1.bf16.msra.mxu0 %v487
  %783 = vmatprep.subr.bf16.mxu0 %v490
  %784 = vmatpush1.bf16.msra.mxu0 %v489
  %785 = vmatprep.subr.bf16.mxu0 %v492
  %786 = vmatpush1.bf16.msra.mxu0 %v491
  %787 = vmatprep.subr.bf16.mxu0 %v494
  %788 = vmatpush1.bf16.msra.mxu0 %v493
  %789 = vmatprep.subr.bf16.mxu0 %v496
  %790 = vmatpush1.bf16.msra.mxu0 %v495
  %791 = vmatprep.subr.bf16.mxu0 %v498
  %792 = vmatpush1.bf16.msra.mxu0 %v497
  %793 = vmatprep.subr.bf16.mxu0 %v500
  %794 = vmatpush1.bf16.msra.mxu0 %v499
  %795 = vmatprep.subr.bf16.mxu0 0
  %796 = vmatpush1.bf16.msra.mxu0 0
  %797 = vmatprep.subr.bf16.mxu0 0
  %798 = vmatpush1.bf16.msra.mxu0 0
  %799 = vmatprep.subr.bf16.mxu0 0
  %800 = vmatpush1.bf16.msra.mxu0 0
  %801 = vmatprep.subr.bf16.mxu0 0
  %802 = vmatpush1.bf16.msra.mxu0 0
  %803 = vmatprep.subr.bf16.mxu0 0
  %804 = vmatpush1.bf16.msra.mxu0 0
  %805 = vmatprep.subr.bf16.mxu0 0
  %806 = vmatpush1.bf16.msra.mxu0 0
  %807 = vmatprep.subr.bf16.mxu0 0
  %808 = vmatpush1.bf16.msra.mxu0 0
  %809 = vmatprep.subr.bf16.mxu0 0
  %810 = vmatpush1.bf16.msra.mxu0 0
  %811 = vmatprep.mubr.bf16.mxu0 0
  %812 = vmatmul.mubr.bf16.gmra.mrb[0].mxu0 %v778
  %v813 = vpop.f32.mrb[0].mxu0
  %v814 = vadd.f32 0.0, %v813
  %v815 = vpop.f32.mrb[0].mxu0
  %v816 = vadd.f32 0.0, %v815
  %v817 = vpop.f32.mrb[0].mxu0
  %v818 = vpop.f32.mrb[0].mxu0
  %819 = vdwg.mxu0
  %v820 = vadd.f32 %v775, %v814
  %v821 = vxor.u32 %v820, 2147483648
  %v822 = vmul.f32 %v821, 1.442695
  %v823 = vpow.pop %v822
  %v824 = vadd.f32 %v823, 1.0
  %v825 = vrcp.pop %v824
  %v826 = vmul.f32 1.0, %v825
  %v827 = vadd.f32 %v776, %v816
  %v828 = vxor.u32 %v827, 2147483648
  %v829 = vmul.f32 %v828, 1.442695
  %v830 = vpow.pop %v829
  %v831 = vadd.f32 %v830, 1.0
  %v832 = vrcp.pop %v831
  %v833 = vmul.f32 1.0, %v832
  %834 = vmatprep.subr.bf16.mxu0 0
  %835 = vmatpush1.bf16.msra.mxu0 %v604
  %836 = vmatprep.subr.bf16.mxu0 0
  %837 = vmatpush1.bf16.msra.mxu0 %v605
  %838 = vmatprep.subr.bf16.mxu0 0
  %839 = vmatpush1.bf16.msra.mxu0 %v606
  %840 = vmatprep.subr.bf16.mxu0 0
  %841 = vmatpush1.bf16.msra.mxu0 %v607
  %842 = vmatprep.subr.bf16.mxu0 0
  %843 = vmatpush1.bf16.msra.mxu0 %v608
  %844 = vmatprep.subr.bf16.mxu0 0
  %845 = vmatpush1.bf16.msra.mxu0 %v609
  %846 = vmatprep.subr.bf16.mxu0 0
  %847 = vmatpush1.bf16.msra.mxu0 %v610
  %848 = vmatprep.subr.bf16.mxu0 0
  %849 = vmatpush1.bf16.msra.mxu0 %v611
  %850 = vmatprep.subr.bf16.mxu0 0
  %851 = vmatpush1.bf16.msra.mxu0 0
  %852 = vmatprep.subr.bf16.mxu0 0
  %853 = vmatpush1.bf16.msra.mxu0 0
  %854 = vmatprep.subr.bf16.mxu0 0
  %855 = vmatpush1.bf16.msra.mxu0 0
  %856 = vmatprep.subr.bf16.mxu0 0
  %857 = vmatpush1.bf16.msra.mxu0 0
  %858 = vmatprep.subr.bf16.mxu0 0
  %859 = vmatpush1.bf16.msra.mxu0 0
  %860 = vmatprep.subr.bf16.mxu0 0
  %861 = vmatpush1.bf16.msra.mxu0 0
  %862 = vmatprep.subr.bf16.mxu0 0
  %863 = vmatpush1.bf16.msra.mxu0 0
  %864 = vmatprep.subr.bf16.mxu0 0
  %865 = vmatpush1.bf16.msra.mxu0 0
  %866 = vmatprep.mubr.bf16.mxu0 0
  %867 = vmatmul.mubr.bf16.gmra.mrb[0].mxu0 %v778
  %v868 = vpop.f32.mrb[0].mxu0
  %v869 = vadd.f32 %v429, %v868
  %v870 = vpop.f32.mrb[0].mxu0
  %v871 = vpop.f32.mrb[0].mxu0
  %v872 = vpop.f32.mrb[0].mxu0
  %873 = vdwg.mxu0
  %v874 = vmul.f32 %v826, %v869
  %v875 = vadd.f32 %v777, %v874
  %v876 = vtanh.pop %v875
  %v877 = vsub.f32 1.0, %v833
  %v878 = vmul.f32 %v877, %v876
  %v879 = vmul.f32 %v833, %v773
  %v880 = vadd.f32 %v878, %v879
  %s881 = scalar_lea.vmem [#allocation2], 72
  %v882 = vld [vmem:[%s881] sm:$0xff]
  %v883 = vld [vmem:[%s881 + $0x8] sm:$0xff]
  %v884 = vld [vmem:[%s881 + $0x10] sm:$0xff]
  %v885 = vpack.c.bf16 %v880, %v880
  %886 = vmatprep.subr.bf16.mxu0 %v486
  %887 = vmatpush1.bf16.msra.mxu0 %v485
  %888 = vmatprep.subr.bf16.mxu0 %v488
  %889 = vmatpush1.bf16.msra.mxu0 %v487
  %890 = vmatprep.subr.bf16.mxu0 %v490
  %891 = vmatpush1.bf16.msra.mxu0 %v489
  %892 = vmatprep.subr.bf16.mxu0 %v492
  %893 = vmatpush1.bf16.msra.mxu0 %v491
  %894 = vmatprep.subr.bf16.mxu0 %v494
  %895 = vmatpush1.bf16.msra.mxu0 %v493
  %896 = vmatprep.subr.bf16.mxu0 %v496
  %897 = vmatpush1.bf16.msra.mxu0 %v495
  %898 = vmatprep.subr.bf16.mxu0 %v498
  %899 = vmatpush1.bf16.msra.mxu0 %v497
  %900 = vmatprep.subr.bf16.mxu0 %v500
  %901 = vmatpush1.bf16.msra.mxu0 %v499
  %902 = vmatprep.subr.bf16.mxu0 0
  %903 = vmatpush1.bf16.msra.mxu0 0
  %904 = vmatprep.subr.bf16.mxu0 0
  %905 = vmatpush1.bf16.msra.mxu0 0
  %906 = vmatprep.subr.bf16.mxu0 0
  %907 = vmatpush1.bf16.msra.mxu0 0
  %908 = vmatprep.subr.bf16.mxu0 0
  %909 = vmatpush1.bf16.msra.mxu0 0
  %910 = vmatprep.subr.bf16.mxu0 0
  %911 = vmatpush1.bf16.msra.mxu0 0
  %912 = vmatprep.subr.bf16.mxu0 0
  %913 = vmatpush1.bf16.msra.mxu0 0
  %914 = vmatprep.subr.bf16.mxu0 0
  %915 = vmatpush1.bf16.msra.mxu0 0
  %916 = vmatprep.subr.bf16.mxu0 0
  %917 = vmatpush1.bf16.msra.mxu0 0
  %918 = vmatprep.mubr.bf16.mxu0 0
  %919 = vmatmul.mubr.bf16.gmra.mrb[0].mxu0 %v885
  %v920 = vpop.f32.mrb[0].mxu0
  %v921 = vadd.f32 0.0, %v920
  %v922 = vpop.f32.mrb[0].mxu0
  %v923 = vadd.f32 0.0, %v922
  %v924 = vpop.f32.mrb[0].mxu0
  %v925 = vpop.f32.mrb[0].mxu0
  %926 = vdwg.mxu0
  %v927 = vadd.f32 %v882, %v921
  %v928 = vxor.u32 %v927, 2147483648
  %v929 = vmul.f32 %v928, 1.442695
  %v930 = vpow.pop %v929
  %v931 = vadd.f32 %v930, 1.0
  %v932 = vrcp.pop %v931
  %v933 = vmul.f32 1.0, %v932
  %v934 = vadd.f32 %v883, %v923
  %v935 = vxor.u32 %v934, 2147483648
  %v936 = vmul.f32 %v935, 1.442695
  %v937 = vpow.pop %v936
  %v938 = vadd.f32 %v937, 1.0
  %v939 = vrcp.pop %v938
  %v940 = vmul.f32 1.0, %v939
  %941 = vmatprep.subr.bf16.mxu0 0
  %942 = vmatpush1.bf16.msra.mxu0 %v604
  %943 = vmatprep.subr.bf16.mxu0 0
  %944 = vmatpush1.bf16.msra.mxu0 %v605
  %945 = vmatprep.subr.bf16.mxu0 0
  %946 = vmatpush1.bf16.msra.mxu0 %v606
  %947 = vmatprep.subr.bf16.mxu0 0
  %948 = vmatpush1.bf16.msra.mxu0 %v607
  %949 = vmatprep.subr.bf16.mxu0 0
  %950 = vmatpush1.bf16.msra.mxu0 %v608
  %951 = vmatprep.subr.bf16.mxu0 0
  %952 = vmatpush1.bf16.msra.mxu0 %v609
  %953 = vmatprep.subr.bf16.mxu0 0
  %954 = vmatpush1.bf16.msra.mxu0 %v610
  %955 = vmatprep.subr.bf16.mxu0 0
  %956 = vmatpush1.bf16.msra.mxu0 %v611
  %957 = vmatprep.subr.bf16.mxu0 0
  %958 = vmatpush1.bf16.msra.mxu0 0
  %959 = vmatprep.subr.bf16.mxu0 0
  %960 = vmatpush1.bf16.msra.mxu0 0
  %961 = vmatprep.subr.bf16.mxu0 0
  %962 = vmatpush1.bf16.msra.mxu0 0
  %963 = vmatprep.subr.bf16.mxu0 0
  %964 = vmatpush1.bf16.msra.mxu0 0
  %965 = vmatprep.subr.bf16.mxu0 0
  %966 = vmatpush1.bf16.msra.mxu0 0
  %967 = vmatprep.subr.bf16.mxu0 0
  %968 = vmatpush1.bf16.msra.mxu0 0
  %969 = vmatprep.subr.bf16.mxu0 0
  %970 = vmatpush1.bf16.msra.mxu0 0
  %971 = vmatprep.subr.bf16.mxu0 0
  %972 = vmatpush1.bf16.msra.mxu0 0
  %973 = vmatprep.mubr.bf16.mxu0 0
  %974 = vmatmul.mubr.bf16.gmra.mrb[0].mxu0 %v885
  %v975 = vpop.f32.mrb[0].mxu0
  %v976 = vadd.f32 %v429, %v975
  %v977 = vpop.f32.mrb[0].mxu0
  %v978 = vpop.f32.mrb[0].mxu0
  %v979 = vpop.f32.mrb[0].mxu0
  %980 = vdwg.mxu0
  %v981 = vmul.f32 %v933, %v976
  %v982 = vadd.f32 %v884, %v981
  %v983 = vtanh.pop %v982
  %v984 = vsub.f32 1.0, %v940
  %v985 = vmul.f32 %v984, %v983
  %v986 = vmul.f32 %v940, %v880
  %v987 = vadd.f32 %v985, %v986
  %s988 = scalar_lea.vmem [#allocation2], 96
  %v989 = vld [vmem:[%s988] sm:$0xff]
  %v990 = vld [vmem:[%s988 + $0x8] sm:$0xff]
  %v991 = vld [vmem:[%s988 + $0x10] sm:$0xff]
  %v992 = vpack.c.bf16 %v987, %v987
  %993 = vmatprep.subr.bf16.mxu0 %v486
  %994 = vmatpush1.bf16.msra.mxu0 %v485
  %995 = vmatprep.subr.bf16.mxu0 %v488
  %996 = vmatpush1.bf16.msra.mxu0 %v487
  %997 = vmatprep.subr.bf16.mxu0 %v490
  %998 = vmatpush1.bf16.msra.mxu0 %v489
  %999 = vmatprep.subr.bf16.mxu0 %v492
  %1000 = vmatpush1.bf16.msra.mxu0 %v491
  %1001 = vmatprep.subr.bf16.mxu0 %v494
  %1002 = vmatpush1.bf16.msra.mxu0 %v493
  %1003 = vmatprep.subr.bf16.mxu0 %v496
  %1004 = vmatpush1.bf16.msra.mxu0 %v495
  %1005 = vmatprep.subr.bf16.mxu0 %v498
  %1006 = vmatpush1.bf16.msra.mxu0 %v497
  %1007 = vmatprep.subr.bf16.mxu0 %v500
  %1008 = vmatpush1.bf16.msra.mxu0 %v499
  %1009 = vmatprep.subr.bf16.mxu0 0
  %1010 = vmatpush1.bf16.msra.mxu0 0
  %1011 = vmatprep.subr.bf16.mxu0 0
  %1012 = vmatpush1.bf16.msra.mxu0 0
  %1013 = vmatprep.subr.bf16.mxu0 0
  %1014 = vmatpush1.bf16.msra.mxu0 0
  %1015 = vmatprep.subr.bf16.mxu0 0
  %1016 = vmatpush1.bf16.msra.mxu0 0
  %1017 = vmatprep.subr.bf16.mxu0 0
  %1018 = vmatpush1.bf16.msra.mxu0 0
  %1019 = vmatprep.subr.bf16.mxu0 0
  %1020 = vmatpush1.bf16.msra.mxu0 0
  %1021 = vmatprep.subr.bf16.mxu0 0
  %1022 = vmatpush1.bf16.msra.mxu0 0
  %1023 = vmatprep.subr.bf16.mxu0 0
  %1024 = vmatpush1.bf16.msra.mxu0 0
  %1025 = vmatprep.mubr.bf16.mxu0 0
  %1026 = vmatmul.mubr.bf16.gmra.mrb[0].mxu0 %v992
  %v1027 = vpop.f32.mrb[0].mxu0
  %v1028 = vadd.f32 0.0, %v1027
  %v1029 = vpop.f32.mrb[0].mxu0
  %v1030 = vadd.f32 0.0, %v1029
  %v1031 = vpop.f32.mrb[0].mxu0
  %v1032 = vpop.f32.mrb[0].mxu0
  %1033 = vdwg.mxu0
  %v1034 = vadd.f32 %v989, %v1028
  %v1035 = vxor.u32 %v1034, 2147483648
  %v1036 = vmul.f32 %v1035, 1.442695
  %v1037 = vpow.pop %v1036
  %v1038 = vadd.f32 %v1037, 1.0
  %v1039 = vrcp.pop %v1038
  %v1040 = vmul.f32 1.0, %v1039
  %v1041 = vadd.f32 %v990, %v1030
  %v1042 = vxor.u32 %v1041, 2147483648
  %v1043 = vmul.f32 %v1042, 1.442695
  %v1044 = vpow.pop %v1043
  %v1045 = vadd.f32 %v1044, 1.0
  %v1046 = vrcp.pop %v1045
  %v1047 = vmul.f32 1.0, %v1046
  %1048 = vmatprep.subr.bf16.mxu0 0
  %1049 = vmatpush1.bf16.msra.mxu0 %v604
  %1050 = vmatprep.subr.bf16.mxu0 0
  %1051 = vmatpush1.bf16.msra.mxu0 %v605
  %1052 = vmatprep.subr.bf16.mxu0 0
  %1053 = vmatpush1.bf16.msra.mxu0 %v606
  %1054 = vmatprep.subr.bf16.mxu0 0
  %1055 = vmatpush1.bf16.msra.mxu0 %v607
  %1056 = vmatprep.subr.bf16.mxu0 0
  %1057 = vmatpush1.bf16.msra.mxu0 %v608
  %1058 = vmatprep.subr.bf16.mxu0 0
  %1059 = vmatpush1.bf16.msra.mxu0 %v609
  %1060 = vmatprep.subr.bf16.mxu0 0
  %1061 = vmatpush1.bf16.msra.mxu0 %v610
  %1062 = vmatprep.subr.bf16.mxu0 0
  %1063 = vmatpush1.bf16.msra.mxu0 %v611
  %1064 = vmatprep.subr.bf16.mxu0 0
  %1065 = vmatpush1.bf16.msra.mxu0 0
  %1066 = vmatprep.subr.bf16.mxu0 0
  %1067 = vmatpush1.bf16.msra.mxu0 0
  %1068 = vmatprep.subr.bf16.mxu0 0
  %1069 = vmatpush1.bf16.msra.mxu0 0
  %1070 = vmatprep.subr.bf16.mxu0 0
  %1071 = vmatpush1.bf16.msra.mxu0 0
  %1072 = vmatprep.subr.bf16.mxu0 0
  %1073 = vmatpush1.bf16.msra.mxu0 0
  %1074 = vmatprep.subr.bf16.mxu0 0
  %1075 = vmatpush1.bf16.msra.mxu0 0
  %1076 = vmatprep.subr.bf16.mxu0 0
  %1077 = vmatpush1.bf16.msra.mxu0 0
  %1078 = vmatprep.subr.bf16.mxu0 0
  %1079 = vmatpush1.bf16.msra.mxu0 0
  %1080 = vmatprep.mubr.bf16.mxu0 0
  %1081 = vmatmul.mubr.bf16.gmra.mrb[0].mxu0 %v992
  %v1082 = vpop.f32.mrb[0].mxu0
  %v1083 = vadd.f32 %v429, %v1082
  %v1084 = vpop.f32.mrb[0].mxu0
  %v1085 = vpop.f32.mrb[0].mxu0
  %v1086 = vpop.f32.mrb[0].mxu0
  %1087 = vdwg.mxu0
  %v1088 = vmul.f32 %v1040, %v1083
  %v1089 = vadd.f32 %v991, %v1088
  %v1090 = vtanh.pop %v1089
  %v1091 = vsub.f32 1.0, %v1047
  %v1092 = vmul.f32 %v1091, %v1090
  %v1093 = vmul.f32 %v1047, %v987
  %v1094 = vadd.f32 %v1092, %v1093
  %s1095 = scalar_lea.vmem [#allocation2], 120
  %v1096 = vld [vmem:[%s1095] sm:$0xff]
  %v1097 = vld [vmem:[%s1095 + $0x8] sm:$0xff]
  %v1098 = vld [vmem:[%s1095 + $0x10] sm:$0xff]
  %v1099 = vpack.c.bf16 %v1094, %v1094
  %1100 = vmatprep.subr.bf16.mxu0 %v486
  %1101 = vmatpush1.bf16.msra.mxu0 %v485
  %1102 = vmatprep.subr.bf16.mxu0 %v488
  %1103 = vmatpush1.bf16.msra.mxu0 %v487
  %1104 = vmatprep.subr.bf16.mxu0 %v490
  %1105 = vmatpush1.bf16.msra.mxu0 %v489
  %1106 = vmatprep.subr.bf16.mxu0 %v492
  %1107 = vmatpush1.bf16.msra.mxu0 %v491
  %1108 = vmatprep.subr.bf16.mxu0 %v494
  %1109 = vmatpush1.bf16.msra.mxu0 %v493
  %1110 = vmatprep.subr.bf16.mxu0 %v496
  %1111 = vmatpush1.bf16.msra.mxu0 %v495
  %1112 = vmatprep.subr.bf16.mxu0 %v498
  %1113 = vmatpush1.bf16.msra.mxu0 %v497
  %1114 = vmatprep.subr.bf16.mxu0 %v500
  %1115 = vmatpush1.bf16.msra.mxu0 %v499
  %1116 = vmatprep.subr.bf16.mxu0 0
  %1117 = vmatpush1.bf16.msra.mxu0 0
  %1118 = vmatprep.subr.bf16.mxu0 0
  %1119 = vmatpush1.bf16.msra.mxu0 0
  %1120 = vmatprep.subr.bf16.mxu0 0
  %1121 = vmatpush1.bf16.msra.mxu0 0
  %1122 = vmatprep.subr.bf16.mxu0 0
  %1123 = vmatpush1.bf16.msra.mxu0 0
  %1124 = vmatprep.subr.bf16.mxu0 0
  %1125 = vmatpush1.bf16.msra.mxu0 0
  %1126 = vmatprep.subr.bf16.mxu0 0
  %1127 = vmatpush1.bf16.msra.mxu0 0
  %1128 = vmatprep.subr.bf16.mxu0 0
  %1129 = vmatpush1.bf16.msra.mxu0 0
  %1130 = vmatprep.subr.bf16.mxu0 0
  %1131 = vmatpush1.bf16.msra.mxu0 0
  %1132 = vmatprep.mubr.bf16.mxu0 0
  %1133 = vmatmul.mubr.bf16.gmra.mrb[0].mxu0 %v1099
  %v1134 = vpop.f32.mrb[0].mxu0
  %v1135 = vadd.f32 0.0, %v1134
  %v1136 = vpop.f32.mrb[0].mxu0
  %v1137 = vadd.f32 0.0, %v1136
  %v1138 = vpop.f32.mrb[0].mxu0
  %v1139 = vpop.f32.mrb[0].mxu0
  %1140 = vdwg.mxu0
  %v1141 = vadd.f32 %v1096, %v1135
  %v1142 = vxor.u32 %v1141, 2147483648
  %v1143 = vmul.f32 %v1142, 1.442695
  %v1144 = vpow.pop %v1143
  %v1145 = vadd.f32 %v1144, 1.0
  %v1146 = vrcp.pop %v1145
  %v1147 = vmul.f32 1.0, %v1146
  %v1148 = vadd.f32 %v1097, %v1137
  %v1149 = vxor.u32 %v1148, 2147483648
  %v1150 = vmul.f32 %v1149, 1.442695
  %v1151 = vpow.pop %v1150
  %v1152 = vadd.f32 %v1151, 1.0
  %v1153 = vrcp.pop %v1152
  %v1154 = vmul.f32 1.0, %v1153
  %1155 = vmatprep.subr.bf16.mxu0 0
  %1156 = vmatpush1.bf16.msra.mxu0 %v604
  %1157 = vmatprep.subr.bf16.mxu0 0
  %1158 = vmatpush1.bf16.msra.mxu0 %v605
  %1159 = vmatprep.subr.bf16.mxu0 0
  %1160 = vmatpush1.bf16.msra.mxu0 %v606
  %1161 = vmatprep.subr.bf16.mxu0 0
  %1162 = vmatpush1.bf16.msra.mxu0 %v607
  %1163 = vmatprep.subr.bf16.mxu0 0
  %1164 = vmatpush1.bf16.msra.mxu0 %v608
  %1165 = vmatprep.subr.bf16.mxu0 0
  %1166 = vmatpush1.bf16.msra.mxu0 %v609
  %1167 = vmatprep.subr.bf16.mxu0 0
  %1168 = vmatpush1.bf16.msra.mxu0 %v610
  %1169 = vmatprep.subr.bf16.mxu0 0
  %1170 = vmatpush1.bf16.msra.mxu0 %v611
  %1171 = vmatprep.subr.bf16.mxu0 0
  %1172 = vmatpush1.bf16.msra.mxu0 0
  %1173 = vmatprep.subr.bf16.mxu0 0
  %1174 = vmatpush1.bf16.msra.mxu0 0
  %1175 = vmatprep.subr.bf16.mxu0 0
  %1176 = vmatpush1.bf16.msra.mxu0 0
  %1177 = vmatprep.subr.bf16.mxu0 0
  %1178 = vmatpush1.bf16.msra.mxu0 0
  %1179 = vmatprep.subr.bf16.mxu0 0
  %1180 = vmatpush1.bf16.msra.mxu0 0
  %1181 = vmatprep.subr.bf16.mxu0 0
  %1182 = vmatpush1.bf16.msra.mxu0 0
  %1183 = vmatprep.subr.bf16.mxu0 0
  %1184 = vmatpush1.bf16.msra.mxu0 0
  %1185 = vmatprep.subr.bf16.mxu0 0
  %1186 = vmatpush1.bf16.msra.mxu0 0
  %1187 = vmatprep.mubr.bf16.mxu0 0
  %1188 = vmatmul.mubr.bf16.gmra.mrb[0].mxu0 %v1099
  %v1189 = vpop.f32.mrb[0].mxu0
  %v1190 = vadd.f32 %v429, %v1189
  %v1191 = vpop.f32.mrb[0].mxu0
  %v1192 = vpop.f32.mrb[0].mxu0
  %v1193 = vpop.f32.mrb[0].mxu0
  %1194 = vdwg.mxu0
  %v1195 = vmul.f32 %v1147, %v1190
  %v1196 = vadd.f32 %v1098, %v1195
  %v1197 = vtanh.pop %v1196
  %v1198 = vsub.f32 1.0, %v1154
  %v1199 = vmul.f32 %v1198, %v1197
  %v1200 = vmul.f32 %v1154, %v1094
  %v1201 = vadd.f32 %v1199, %v1200
  %s1202 = scalar_lea.vmem [#allocation2], 144
  %v1203 = vld [vmem:[%s1202] sm:$0xff]
  %v1204 = vld [vmem:[%s1202 + $0x8] sm:$0xff]
  %v1205 = vld [vmem:[%s1202 + $0x10] sm:$0xff]
  %v1206 = vpack.c.bf16 %v1201, %v1201
  %1207 = vmatprep.subr.bf16.mxu0 %v486
  %1208 = vmatpush1.bf16.msra.mxu0 %v485
  %1209 = vmatprep.subr.bf16.mxu0 %v488
  %1210 = vmatpush1.bf16.msra.mxu0 %v487
  %1211 = vmatprep.subr.bf16.mxu0 %v490
  %1212 = vmatpush1.bf16.msra.mxu0 %v489
  %1213 = vmatprep.subr.bf16.mxu0 %v492
  %1214 = vmatpush1.bf16.msra.mxu0 %v491
  %1215 = vmatprep.subr.bf16.mxu0 %v494
  %1216 = vmatpush1.bf16.msra.mxu0 %v493
  %1217 = vmatprep.subr.bf16.mxu0 %v496
  %1218 = vmatpush1.bf16.msra.mxu0 %v495
  %1219 = vmatprep.subr.bf16.mxu0 %v498
  %1220 = vmatpush1.bf16.msra.mxu0 %v497
  %1221 = vmatprep.subr.bf16.mxu0 %v500
  %1222 = vmatpush1.bf16.msra.mxu0 %v499
  %1223 = vmatprep.subr.bf16.mxu0 0
  %1224 = vmatpush1.bf16.msra.mxu0 0
  %1225 = vmatprep.subr.bf16.mxu0 0
  %1226 = vmatpush1.bf16.msra.mxu0 0
  %1227 = vmatprep.subr.bf16.mxu0 0
  %1228 = vmatpush1.bf16.msra.mxu0 0
  %1229 = vmatprep.subr.bf16.mxu0 0
  %1230 = vmatpush1.bf16.msra.mxu0 0
  %1231 = vmatprep.subr.bf16.mxu0 0
  %1232 = vmatpush1.bf16.msra.mxu0 0
  %1233 = vmatprep.subr.bf16.mxu0 0
  %1234 = vmatpush1.bf16.msra.mxu0 0
  %1235 = vmatprep.subr.bf16.mxu0 0
  %1236 = vmatpush1.bf16.msra.mxu0 0
  %1237 = vmatprep.subr.bf16.mxu0 0
  %1238 = vmatpush1.bf16.msra.mxu0 0
  %1239 = vmatprep.mubr.bf16.mxu0 0
  %1240 = vmatmul.mubr.bf16.gmra.mrb[0].mxu0 %v1206
  %v1241 = vpop.f32.mrb[0].mxu0
  %v1242 = vadd.f32 0.0, %v1241
  %v1243 = vpop.f32.mrb[0].mxu0
  %v1244 = vadd.f32 0.0, %v1243
  %v1245 = vpop.f32.mrb[0].mxu0
  %v1246 = vpop.f32.mrb[0].mxu0
  %1247 = vdwg.mxu0
  %v1248 = vadd.f32 %v1203, %v1242
  %v1249 = vxor.u32 %v1248, 2147483648
  %v1250 = vmul.f32 %v1249, 1.442695
  %v1251 = vpow.pop %v1250
  %v1252 = vadd.f32 %v1251, 1.0
  %v1253 = vrcp.pop %v1252
  %v1254 = vmul.f32 1.0, %v1253
  %v1255 = vadd.f32 %v1204, %v1244
  %v1256 = vxor.u32 %v1255, 2147483648
  %v1257 = vmul.f32 %v1256, 1.442695
  %v1258 = vpow.pop %v1257
  %v1259 = vadd.f32 %v1258, 1.0
  %v1260 = vrcp.pop %v1259
  %v1261 = vmul.f32 1.0, %v1260
  %1262 = vmatprep.subr.bf16.mxu0 0
  %1263 = vmatpush1.bf16.msra.mxu0 %v604
  %1264 = vmatprep.subr.bf16.mxu0 0
  %1265 = vmatpush1.bf16.msra.mxu0 %v605
  %1266 = vmatprep.subr.bf16.mxu0 0
  %1267 = vmatpush1.bf16.msra.mxu0 %v606
  %1268 = vmatprep.subr.bf16.mxu0 0
  %1269 = vmatpush1.bf16.msra.mxu0 %v607
  %1270 = vmatprep.subr.bf16.mxu0 0
  %1271 = vmatpush1.bf16.msra.mxu0 %v608
  %1272 = vmatprep.subr.bf16.mxu0 0
  %1273 = vmatpush1.bf16.msra.mxu0 %v609
  %1274 = vmatprep.subr.bf16.mxu0 0
  %1275 = vmatpush1.bf16.msra.mxu0 %v610
  %1276 = vmatprep.subr.bf16.mxu0 0
  %1277 = vmatpush1.bf16.msra.mxu0 %v611
  %1278 = vmatprep.subr.bf16.mxu0 0
  %1279 = vmatpush1.bf16.msra.mxu0 0
  %1280 = vmatprep.subr.bf16.mxu0 0
  %1281 = vmatpush1.bf16.msra.mxu0 0
  %1282 = vmatprep.subr.bf16.mxu0 0
  %1283 = vmatpush1.bf16.msra.mxu0 0
  %1284 = vmatprep.subr.bf16.mxu0 0
  %1285 = vmatpush1.bf16.msra.mxu0 0
  %1286 = vmatprep.subr.bf16.mxu0 0
  %1287 = vmatpush1.bf16.msra.mxu0 0
  %1288 = vmatprep.subr.bf16.mxu0 0
  %1289 = vmatpush1.bf16.msra.mxu0 0
  %1290 = vmatprep.subr.bf16.mxu0 0
  %1291 = vmatpush1.bf16.msra.mxu0 0
  %1292 = vmatprep.subr.bf16.mxu0 0
  %1293 = vmatpush1.bf16.msra.mxu0 0
  %1294 = vmatprep.mubr.bf16.mxu0 0
  %1295 = vmatmul.mubr.bf16.gmra.mrb[0].mxu0 %v1206
  %v1296 = vpop.f32.mrb[0].mxu0
  %v1297 = vadd.f32 %v429, %v1296
  %v1298 = vpop.f32.mrb[0].mxu0
  %v1299 = vpop.f32.mrb[0].mxu0
  %v1300 = vpop.f32.mrb[0].mxu0
  %1301 = vdwg.mxu0
  %v1302 = vmul.f32 %v1254, %v1297
  %v1303 = vadd.f32 %v1205, %v1302
  %v1304 = vtanh.pop %v1303
  %v1305 = vsub.f32 1.0, %v1261
  %v1306 = vmul.f32 %v1305, %v1304
  %v1307 = vmul.f32 %v1261, %v1201
  %v1308 = vadd.f32 %v1306, %v1307
  %v1309 = vsel %vm433, %v1308, %v1201
  %s1310 = scalar_lea.vmem [#allocation2], 168
  %v1311 = vld [vmem:[%s1310] sm:$0xff]
  %v1312 = vld [vmem:[%s1310 + $0x8] sm:$0xff]
  %v1313 = vld [vmem:[%s1310 + $0x10] sm:$0xff]
  %v1314 = vpack.c.bf16 %v1309, %v1309
  %1315 = vmatprep.subr.bf16.mxu0 %v486
  %1316 = vmatpush1.bf16.msra.mxu0 %v485
  %1317 = vmatprep.subr.bf16.mxu0 %v488
  %1318 = vmatpush1.bf16.msra.mxu0 %v487
  %1319 = vmatprep.subr.bf16.mxu0 %v490
  %1320 = vmatpush1.bf16.msra.mxu0 %v489
  %1321 = vmatprep.subr.bf16.mxu0 %v492
  %1322 = vmatpush1.bf16.msra.mxu0 %v491
  %1323 = vmatprep.subr.bf16.mxu0 %v494
  %1324 = vmatpush1.bf16.msra.mxu0 %v493
  %1325 = vmatprep.subr.bf16.mxu0 %v496
  %1326 = vmatpush1.bf16.msra.mxu0 %v495
  %1327 = vmatprep.subr.bf16.mxu0 %v498
  %1328 = vmatpush1.bf16.msra.mxu0 %v497
  %1329 = vmatprep.subr.bf16.mxu0 %v500
  %1330 = vmatpush1.bf16.msra.mxu0 %v499
  %1331 = vmatprep.subr.bf16.mxu0 0
  %1332 = vmatpush1.bf16.msra.mxu0 0
  %1333 = vmatprep.subr.bf16.mxu0 0
  %1334 = vmatpush1.bf16.msra.mxu0 0
  %1335 = vmatprep.subr.bf16.mxu0 0
  %1336 = vmatpush1.bf16.msra.mxu0 0
  %1337 = vmatprep.subr.bf16.mxu0 0
  %1338 = vmatpush1.bf16.msra.mxu0 0
  %1339 = vmatprep.subr.bf16.mxu0 0
  %1340 = vmatpush1.bf16.msra.mxu0 0
  %1341 = vmatprep.subr.bf16.mxu0 0
  %1342 = vmatpush1.bf16.msra.mxu0 0
  %1343 = vmatprep.subr.bf16.mxu0 0
  %1344 = vmatpush1.bf16.msra.mxu0 0
  %1345 = vmatprep.subr.bf16.mxu0 0
  %1346 = vmatpush1.bf16.msra.mxu0 0
  %1347 = vmatprep.mubr.bf16.mxu0 0
  %1348 = vmatmul.mubr.bf16.gmra.mrb[0].mxu0 %v1314
  %v1349 = vpop.f32.mrb[0].mxu0
  %v1350 = vadd.f32 0.0, %v1349
  %v1351 = vpop.f32.mrb[0].mxu0
  %v1352 = vadd.f32 0.0, %v1351
  %v1353 = vpop.f32.mrb[0].mxu0
  %v1354 = vpop.f32.mrb[0].mxu0
  %1355 = vdwg.mxu0
  %v1356 = vadd.f32 %v1311, %v1350
  %v1357 = vxor.u32 %v1356, 2147483648
  %v1358 = vmul.f32 %v1357, 1.442695
  %v1359 = vpow.pop %v1358
  %v1360 = vadd.f32 %v1359, 1.0
  %v1361 = vrcp.pop %v1360
  %v1362 = vmul.f32 1.0, %v1361
  %v1363 = vadd.f32 %v1312, %v1352
  %v1364 = vxor.u32 %v1363, 2147483648
  %v1365 = vmul.f32 %v1364, 1.442695
  %v1366 = vpow.pop %v1365
  %v1367 = vadd.f32 %v1366, 1.0
  %v1368 = vrcp.pop %v1367
  %v1369 = vmul.f32 1.0, %v1368
  %1370 = vmatprep.subr.bf16.mxu0 0
  %1371 = vmatpush1.bf16.msra.mxu0 %v604
  %1372 = vmatprep.subr.bf16.mxu0 0
  %1373 = vmatpush1.bf16.msra.mxu0 %v605
  %1374 = vmatprep.subr.bf16.mxu0 0
  %1375 = vmatpush1.bf16.msra.mxu0 %v606
  %1376 = vmatprep.subr.bf16.mxu0 0
  %1377 = vmatpush1.bf16.msra.mxu0 %v607
  %1378 = vmatprep.subr.bf16.mxu0 0
  %1379 = vmatpush1.bf16.msra.mxu0 %v608
  %1380 = vmatprep.subr.bf16.mxu0 0
  %1381 = vmatpush1.bf16.msra.mxu0 %v609
  %1382 = vmatprep.subr.bf16.mxu0 0
  %1383 = vmatpush1.bf16.msra.mxu0 %v610
  %1384 = vmatprep.subr.bf16.mxu0 0
  %1385 = vmatpush1.bf16.msra.mxu0 %v611
  %1386 = vmatprep.subr.bf16.mxu0 0
  %1387 = vmatpush1.bf16.msra.mxu0 0
  %1388 = vmatprep.subr.bf16.mxu0 0
  %1389 = vmatpush1.bf16.msra.mxu0 0
  %1390 = vmatprep.subr.bf16.mxu0 0
  %1391 = vmatpush1.bf16.msra.mxu0 0
  %1392 = vmatprep.subr.bf16.mxu0 0
  %1393 = vmatpush1.bf16.msra.mxu0 0
  %1394 = vmatprep.subr.bf16.mxu0 0
  %1395 = vmatpush1.bf16.msra.mxu0 0
  %1396 = vmatprep.subr.bf16.mxu0 0
  %1397 = vmatpush1.bf16.msra.mxu0 0
  %1398 = vmatprep.subr.bf16.mxu0 0
  %1399 = vmatpush1.bf16.msra.mxu0 0
  %1400 = vmatprep.subr.bf16.mxu0 0
  %1401 = vmatpush1.bf16.msra.mxu0 0
  %1402 = vmatprep.mubr.bf16.mxu0 0
  %1403 = vmatmul.mubr.bf16.gmra.mrb[0].mxu0 %v1314
  %v1404 = vpop.f32.mrb[0].mxu0
  %v1405 = vadd.f32 %v429, %v1404
  %v1406 = vpop.f32.mrb[0].mxu0
  %v1407 = vpop.f32.mrb[0].mxu0
  %v1408 = vpop.f32.mrb[0].mxu0
  %1409 = vdwg.mxu0
  %v1410 = vmul.f32 %v1362, %v1405
  %v1411 = vadd.f32 %v1313, %v1410
  %v1412 = vtanh.pop %v1411
  %v1413 = vsub.f32 1.0, %v1369
  %v1414 = vmul.f32 %v1413, %v1412
  %v1415 = vmul.f32 %v1369, %v1309
  %v1416 = vadd.f32 %v1414, %v1415
  %v1417 = vsel %vm433, %v1416, %v1201
  %1419 = vrot.lane.b32.xlu0 %v1417, 96
  %v1420 = vpop.permute.xlu0 %1419
  %v1422 = vadd.f32 %v1417, %v1420
  %v1423 = vpack.c.bf16 %v1417, %v1417
  %v1424 = vld [vmem:[%s6] sm:$0xf]
  %v1425 = vld [vmem:[%s6 + $0x4] sm:$0xf]
  %v1426 = vld [vmem:[%s6 + $0x8] sm:$0xf]
  %v1427 = vld [vmem:[%s6 + $0xc] sm:$0xf]
  %v1428 = vld [vmem:[%s6 + $0x10] sm:$0xf]
  %v1429 = vld [vmem:[%s6 + $0x14] sm:$0xf]
  %v1430 = vld [vmem:[%s6 + $0x18] sm:$0xf]
  %v1431 = vld [vmem:[%s6 + $0x1c] sm:$0xf]
  %v1432 = vld [vmem:[%s6 + $0x20] sm:$0xf]
  %v1433 = vld [vmem:[%s6 + $0x24] sm:$0xf]
  %v1434 = vld [vmem:[%s6 + $0x28] sm:$0xf]
  %v1435 = vld [vmem:[%s6 + $0x2c] sm:$0xf]
  %v1436 = vld [vmem:[%s6 + $0x30] sm:$0xf]
  %v1437 = vld [vmem:[%s6 + $0x34] sm:$0xf]
  %v1438 = vld [vmem:[%s6 + $0x38] sm:$0xf]
  %v1439 = vld [vmem:[%s6 + $0x3c] sm:$0xf]
  %v1456 = vunpack.c.l.b16 %v1424
  %v1457 = vunpack.c.l.b16 %v1425
  %v1458 = vunpack.c.l.b16 %v1426
  %v1459 = vunpack.c.l.b16 %v1427
  %v1460 = vunpack.c.l.b16 %v1428
  %v1461 = vunpack.c.l.b16 %v1429
  %v1462 = vunpack.c.l.b16 %v1430
  %v1463 = vunpack.c.l.b16 %v1431
  %v1464 = vunpack.c.l.b16 %v1432
  %v1465 = vunpack.c.l.b16 %v1433
  %v1466 = vunpack.c.l.b16 %v1434
  %v1467 = vunpack.c.l.b16 %v1435
  %v1468 = vunpack.c.l.b16 %v1436
  %v1469 = vunpack.c.l.b16 %v1437
  %v1470 = vunpack.c.l.b16 %v1438
  %v1471 = vunpack.c.l.b16 %v1439
  %v1472 = vpack.c.b16 %v1457, %v1456
  %v1473 = vpack.c.b16 %v1459, %v1458
  %v1474 = vpack.c.b16 %v1461, %v1460
  %v1475 = vpack.c.b16 %v1463, %v1462
  %v1476 = vpack.c.b16 %v1465, %v1464
  %v1477 = vpack.c.b16 %v1467, %v1466
  %v1478 = vpack.c.b16 %v1469, %v1468
  %v1479 = vpack.c.b16 %v1471, %v1470
  %1488 = vmatprep.subr.bf16.mxu0 0
  %1489 = vmatpush1.bf16.msra.mxu0 %v1472
  %1490 = vmatprep.subr.bf16.mxu0 0
  %1491 = vmatpush1.bf16.msra.mxu0 %v1473
  %1492 = vmatprep.subr.bf16.mxu0 0
  %1493 = vmatpush1.bf16.msra.mxu0 %v1474
  %1494 = vmatprep.subr.bf16.mxu0 0
  %1495 = vmatpush1.bf16.msra.mxu0 %v1475
  %1496 = vmatprep.subr.bf16.mxu0 0
  %1497 = vmatpush1.bf16.msra.mxu0 %v1476
  %1498 = vmatprep.subr.bf16.mxu0 0
  %1499 = vmatpush1.bf16.msra.mxu0 %v1477
  %1500 = vmatprep.subr.bf16.mxu0 0
  %1501 = vmatpush1.bf16.msra.mxu0 %v1478
  %1502 = vmatprep.subr.bf16.mxu0 0
  %1503 = vmatpush1.bf16.msra.mxu0 %v1479
  %1504 = vmatprep.subr.bf16.mxu0 0
  %1505 = vmatpush1.bf16.msra.mxu0 0
  %1506 = vmatprep.subr.bf16.mxu0 0
  %1507 = vmatpush1.bf16.msra.mxu0 0
  %1508 = vmatprep.subr.bf16.mxu0 0
  %1509 = vmatpush1.bf16.msra.mxu0 0
  %1510 = vmatprep.subr.bf16.mxu0 0
  %1511 = vmatpush1.bf16.msra.mxu0 0
  %1512 = vmatprep.subr.bf16.mxu0 0
  %1513 = vmatpush1.bf16.msra.mxu0 0
  %1514 = vmatprep.subr.bf16.mxu0 0
  %1515 = vmatpush1.bf16.msra.mxu0 0
  %1516 = vmatprep.subr.bf16.mxu0 0
  %1517 = vmatpush1.bf16.msra.mxu0 0
  %1518 = vmatprep.subr.bf16.mxu0 0
  %1519 = vmatpush1.bf16.msra.mxu0 0
  %1520 = vmatprep.mubr.bf16.mxu0 0
  %1521 = vmatmul.mubr.bf16.gmra.mrb[0].mxu0 %v1423
  %v1522 = vpop.f32.mrb[0].mxu0
  %v1523 = vadd.f32 0.0, %v1522
  %v1524 = vpop.f32.mrb[0].mxu0
  %v1525 = vpop.f32.mrb[0].mxu0
  %v1526 = vpop.f32.mrb[0].mxu0
  %1527 = vdwg.mxu0
  %1529 = vrot.lane.b32.xlu0 %v1422, 64
  %v1530 = vpop.permute.xlu0 %1529
  %v1532 = vmul.f32 %v1523, %v1530
  %vm1533 = vcmask 261120
  %v1534 = vsel %vm1533, %v1532, 0.0
  %1535 = vadd.xlane.f32.xlu0 %v1534
  %v1536 = vpop.xlane.xlu0 %1535
  %v1537 = vld [vmem:[%s7] sm:$0x1]
  %v1539 = vlaneseq
  %v1540 = vshrl.u32 %v1539, 7
  %v1541 = vsub.s32 0, %v1540
  %v1542 = vrot.slane %v1537, %v1541
  %v1544 = vmul.f32 %v1536, %v1542
  %1546 = vrot.lane.b32.xlu0 %v1544, 32
  %v1547 = vpop.permute.xlu0 %1546
  %v1549 = vadd.f32 %v1523, %v1547
  %v1550 = vld [vmem:[%s8] sm:$0x1]
  %v1552 = vlaneseq
  %v1553 = vshrl.u32 %v1552, 7
  %v1554 = vsub.s32 0, %v1553
  %v1555 = vrot.slane %v1550, %v1554
  %1556 = vrot.lane.b32.xlu0 %v1555, 32
  %v1557 = vpop.permute.xlu0 %1556
  %v1559 = vadd.f32 %v1549, %v1557
  %v1560 = vtanh.pop %v1559
  %v1561 = vld [vmem:[%s9] sm:$0x1]
  %v1563 = vlaneseq
  %v1564 = vshrl.u32 %v1563, 7
  %v1565 = vsub.s32 0, %v1564
  %v1566 = vrot.slane %v1561, %v1565
  %1567 = vrot.lane.b32.xlu0 %v1566, 32
  %v1568 = vpop.permute.xlu0 %1567
  %v1570 = vmul.f32 %v1560, %v1568
  %1572 = vrot.lane.b32.xlu0 %v1570, 96
  %v1573 = vpop.permute.xlu0 %1572
  %v1575 = vsel %vm1533, %v1573, 0.0
  %1576 = vadd.xlane.f32.xlu0 %v1575
  %v1577 = vpop.xlane.xlu0 %1576
  %v1578 = vld [vmem:[#allocation3] sm:$0x1]
  %v1580 = vlaneseq
  %v1581 = vshrl.u32 %v1580, 7
  %v1582 = vsub.s32 0, %v1581
  %v1583 = vrot.slane %v1578, %v1582
  %v1585 = vadd.f32 %v1577, %v1583
  %v1586 = vxor.u32 %v1585, 2147483648
  %v1587 = vmul.f32 %v1586, 1.442695
  %v1588 = vpow.pop %v1587
  %v1589 = vadd.f32 %v1588, 1.0
  %v1590 = vrcp.pop %v1589
  %v1591 = vmul.f32 1.0, %v1590
  %1593 = vset.pattern.permute.xlu0 0
  %1594 = vperm.xlu0 %1593, %v1591
  %v1595 = vpop.permute.xlu0 %1594
  %1597 = vst [vmem:[%s11] sm:$0xff] %v1595
  // Predicated region
  $region46: #{ruber_unrefer_forward.1} parent=0 // pred_check
    _
  $region47: #{ruber_unrefer_forward.1} parent=0 // pred_check_branch
    %1599 = sbr.rel (0) target = $region49
  $region48: #{ruber_unrefer_forward.1} parent=0 // pred_region
    _
  $region49: #{ruber_unrefer_forward.1} parent=0 // pred_fallthru
    _
  // Predicated region
  $region50: #{ruber_unrefer_forward.1} parent=0 // pred_check
    _
  $region51: #{ruber_unrefer_forward.1} parent=0 // pred_check_branch
    %1601 = sbr.rel (0) target = $region53
  $region52: #{ruber_unrefer_forward.1} parent=0 // pred_region
    _
  $region53: #{ruber_unrefer_forward.1} parent=0 // pred_fallthru
    _

</llo_original>
